<compile_context>
chip_gen: v5e
topology: v5e:2x2
jax: 0.10.0
libtpu: 0.0.40
codegen_flags: <defaults>
</compile_context>

<pallas_src>
import functools

import jax
import jax.numpy as jnp
from jax.experimental import pallas as pl
from jax.experimental.pallas import tpu as pltpu


# ---------------------------------------------------------------- small math helpers
def _leaky_relu(x, alpha):
    return jnp.where(x > 0, x, alpha * x)


def _elu(x):
    # exp only on the (clamped) negative branch -> no inf in the unselected branch.
    return jnp.where(x > 0, x, jnp.exp(jnp.minimum(x, 0.0)) - 1.0)


# ---------------------------------------------------------------- fused GAT + FFN kernel
def _fused_kernel(x_ref, adj_ref, w_all_ref, a1b_ref, a2b_ref,
                  wo_ref, a1o_ref, a2o_ref,
                  w1_ref, b1_ref, w2_ref, b2_ref, gam_ref, beta_ref,
                  out_ref, *, bb, n, n_heads, hid, dout, alpha, eps):
    bf16 = jnp.bfloat16

    # Fold the Bb graphs of this grid step into the matmul row dimension.
    x = x_ref[...].reshape(bb * n, -1)                       # [Bb*N, Fin] bf16 (shipped as bf16)
    adj_mask = adj_ref[...].astype(jnp.float32) > 0.0        # int8 -> mask, reused H+1 times
    neg_fill = jnp.float32(-9e15)

    def masked_softmax(e):
        e = jnp.where(adj_mask, e, neg_fill)
        e = e - jnp.max(e, axis=-1, keepdims=True)
        p = jnp.exp(e)
        return p * pl.reciprocal(jnp.sum(p, axis=-1, keepdims=True), approx=True)

    # --- all heads' Wh and both attention projections: 3 lane-dense MXU ops for all graphs ---
    wh_all = jnp.dot(x, w_all_ref[...], preferred_element_type=jnp.float32)       # [Bb*N, H*hid] f32
    wh_b = wh_all.astype(bf16)
    f1_all = jnp.dot(wh_b, a1b_ref[...], preferred_element_type=jnp.float32)      # [Bb*N, H]
    # (Wh_h @ a2_h)^T for every head/graph at once (a @ b^T form -> no in-kernel transpose).
    f2t_all = jax.lax.dot_general(a2b_ref[...], wh_b, (((1,), (1,)), ((), ())),
                                  preferred_element_type=jnp.float32)             # [H, Bb*N]

    # --- per-graph, per-head attention; head outputs stay in vregs and are concatenated once ---
    xc_rows = []
    for b in range(bb):                                      # static unroll: bb, n_heads are small
        r0 = b * n
        heads = []
        for h in range(n_heads):
            lo = h * hid
            wh = wh_b[r0:r0 + n, lo:lo + hid]                                      # [N, hid] bf16
            e = _leaky_relu(f1_all[r0:r0 + n, h:h + 1] + f2t_all[h:h + 1, r0:r0 + n], alpha)
            attn = masked_softmax(e)                                               # [N, N] f32
            heads.append(_elu(jnp.dot(attn.astype(bf16), wh,
                                      preferred_element_type=jnp.float32)))        # [N, hid]
        xc_rows.append(jnp.concatenate(heads, axis=-1))                            # [N, H*hid]
    xc = jnp.concatenate(xc_rows, axis=0).astype(bf16)                             # [Bb*N, H*hid]

    # --- out-attention over the concatenated heads (projections batched over all graphs) ---
    wh_o = jnp.dot(xc, wo_ref[...], preferred_element_type=jnp.float32)            # [Bb*N, Dout]
    wh_ob = wh_o.astype(bf16)
    f1_o = jnp.dot(wh_ob, a1o_ref[...], preferred_element_type=jnp.float32)        # [Bb*N, 1]
    f2t_o = jax.lax.dot_general(a2o_ref[...], wh_ob, (((1,), (1,)), ((), ())),
                                preferred_element_type=jnp.float32)                # [1, Bb*N]
    g_rows = []
    for b in range(bb):
        r0 = b * n
        e = _leaky_relu(f1_o[r0:r0 + n, :] + f2t_o[:, r0:r0 + n], alpha)
        attn = masked_softmax(e)
        g_rows.append(_elu(jnp.dot(attn.astype(bf16), wh_ob[r0:r0 + n, :],
                                   preferred_element_type=jnp.float32)))            # [N, Dout]
    g = jnp.concatenate(g_rows, axis=0)                                             # [Bb*N, Dout] f32

    # --- position-wise FFN (1x1 convs) + residual + LayerNorm, all graphs at once ---
    h1 = jnp.dot(g.astype(bf16), w1_ref[...], preferred_element_type=jnp.float32) + b1_ref[...]
    h1 = jnp.maximum(h1, 0.0)                                                       # ReLU
    y = jnp.dot(h1.astype(bf16), w2_ref[...], preferred_element_type=jnp.float32) + b2_ref[...]
    y = y + g                                                                       # residual
    mu = jnp.mean(y, axis=-1, keepdims=True)
    var = jnp.mean((y - mu) ** 2, axis=-1, keepdims=True)
    yn = (y - mu) * jax.lax.rsqrt(var + eps)
    yn = yn * gam_ref[...] + beta_ref[...]                                          # LayerNorm affine

    # TODO(synk): lane-dense output store (pad Dout to 128 or flatten to (Bb, N*Dout)) for prod shapes.
    out_ref[...] = yn.reshape(bb, n, dout)


# ---------------------------------------------------------------- wrapper helpers
def _block_diag_cols(vecs):
    """[H, hid] per-head vectors -> [H*hid, H] column block-diagonal."""
    H, hid = vecs.shape
    out = jnp.zeros((H * hid, H), jnp.float32)
    for h in range(H):
        out = out.at[h * hid:(h + 1) * hid, h].set(vecs[h])
    return out


def _block_diag_rows(vecs):
    """[H, hid] per-head vectors -> [H, H*hid] row block-diagonal."""
    H, hid = vecs.shape
    out = jnp.zeros((H, H * hid), jnp.float32)
    for h in range(H):
        out = out.at[h, h * hid:(h + 1) * hid].set(vecs[h])
    return out


def _choose_batch_block(B, N, target_rows=256):
    """Largest divisor of B with Bb*N <= target_rows (MXU row occupancy); only split into >=2
    grid steps (two TensorCores on v7x) if each block would still carry >=128 rows."""
    divisors = [d for d in range(1, B + 1) if B % d == 0]
    bb = 1
    for d in divisors:
        if d * N <= target_rows:
            bb = d
    if B // bb < 2:
        for d in sorted(divisors, reverse=True):
            if B // d >= 2 and d * N >= 128:
                bb = d
                break
    return bb


# ---------------------------------------------------------------- wrapper
def graph_encoder_layer(x, adj, params, *, alpha, eps=1e-5):
    B, N, Fin = x.shape
    H, _, hid = params["w_heads"].shape
    Dout = params["w_out"].shape[-1]
    Dff = params["w1"].shape[-1]

    bb = _choose_batch_block(B, N)
    bf16 = jnp.bfloat16

    # One-time host-side weight packing / dtype prep (layout plumbing, not per-step compute).
    w_all = jnp.transpose(params["w_heads"], (1, 0, 2)).reshape(Fin, H * hid).astype(bf16)
    a1_blk = _block_diag_cols(params["a1_h"]).astype(bf16)              # [H*hid, H]
    a2_blk = _block_diag_rows(params["a2_h"]).astype(bf16)              # [H, H*hid]
    w_out = params["w_out"].astype(bf16)
    a1_o = params["a1_o"].reshape(Dout, 1).astype(bf16)
    a2_o = params["a2_o"].reshape(1, Dout).astype(bf16)
    w1 = params["w1"].astype(bf16)
    w2 = params["w2"].astype(bf16)

    x_bf = x.astype(bf16)                          # half the activation DMA
    adj_i8 = (adj > 0).astype(jnp.int8)            # 4x less HBM/VMEM than f32 adjacency

    def const(shape):
        # Constant across the grid -> single-buffer (no pointless double-buffer VMEM).
        return pl.BlockSpec(shape, lambda g: (0,) * len(shape), pipeline_mode=pl.Buffered(1))

    kernel = functools.partial(_fused_kernel, bb=bb, n=N, n_heads=H, hid=hid,
                               dout=Dout, alpha=alpha, eps=eps)

    return pl.pallas_call(
        kernel,
        out_shape=jax.ShapeDtypeStruct((B, N, Dout), jnp.float32),
        grid=(B // bb,),
        in_specs=[
            pl.BlockSpec((bb, N, Fin), lambda g: (g, 0, 0)),   # x: Bb graphs per grid step
            const((N, N)),                                     # adjacency mask (int8)
            const((Fin, H * hid)),                             # packed per-head W (bf16)
            const((H * hid, H)),                               # a1 block-diag (cols)
            const((H, H * hid)),                               # a2 block-diag (rows)
            const((H * hid, Dout)),                            # out-attention weight
            const((Dout, 1)),                                  # a1_out
            const((1, Dout)),                                  # a2_out
            const((Dout, Dff)),                                # conv1 weight (as linear)
            const((1, Dff)),                                   # conv1 bias (f32)
            const((Dff, Dout)),                                # conv2 weight
            const((1, Dout)),                                  # conv2 bias (f32)
            const((1, Dout)),                                  # LayerNorm gamma
            const((1, Dout)),                                  # LayerNorm beta
        ],
        out_specs=pl.BlockSpec((bb, N, Dout), lambda g: (g, 0, 0)),
        compiler_params=pltpu.CompilerParams(
            dimension_semantics=("parallel",),
            vmem_limit_bytes=64 * 1024 * 1024),
    )(x_bf, adj_i8, w_all, a1_blk, a2_blk, w_out, a1_o, a2_o,
      w1, params["b1"], w2, params["b2"], params["gamma"], params["beta"])


# ---------------------------------------------------------------- pure-JAX reference (f32)
def _ref_attn(h, adj, w, a1, a2, alpha):
    wh = h @ w
    f1 = (wh * a1).sum(-1, keepdims=True)
    f2 = (wh * a2).sum(-1, keepdims=True)
    e = jnp.where(f1 + f2.T > 0, f1 + f2.T, alpha * (f1 + f2.T))
    e = jnp.where(adj > 0, e, -9e15)
    return jax.nn.softmax(e, axis=-1) @ wh


def ref_forward(x, adj, p, alpha):
    def per_batch(xb):
        heads = [jax.nn.elu(_ref_attn(xb, adj, p["w_heads"][h],
                                      p["a1_h"][h], p["a2_h"][h], alpha))
                 for h in range(p["w_heads"].shape[0])]
        xc = jnp.concatenate(heads, axis=-1)
        g = jax.nn.elu(_ref_attn(xc, adj, p["w_out"], p["a1_o"][0], p["a2_o"][0], alpha))
        h = jax.nn.relu(g @ p["w1"] + p["b1"][0])
        y = h @ p["w2"] + p["b2"][0] + g
        mu = y.mean(-1, keepdims=True)
        var = ((y - mu) ** 2).mean(-1, keepdims=True)
        return (y - mu) / jnp.sqrt(var + 1e-5) * p["gamma"][0] + p["beta"][0]
    return jax.vmap(per_batch)(x)


# ---------------------------------------------------------------- main
if __name__ == "__main__":
    B, N = 2, 8                      # batch, N_nodes (src_len)
    IN_F, FF, OUT_F, HEADS = 16, 32, 16, 4
    ALPHA = 0.01
    scale = 0.1

    key = jax.random.PRNGKey(0)
    ks = jax.random.split(key, 12)

    params = {
        "w_heads": jax.random.normal(ks[0], (HEADS, IN_F, FF), jnp.float32) * scale,
        "a1_h":    jax.random.normal(ks[1], (HEADS, FF), jnp.float32) * scale,
        "a2_h":    jax.random.normal(ks[2], (HEADS, FF), jnp.float32) * scale,
        "w_out":   jax.random.normal(ks[3], (HEADS * FF, OUT_F), jnp.float32) * scale,
        "a1_o":    jax.random.normal(ks[4], (1, OUT_F), jnp.float32) * scale,
        "a2_o":    jax.random.normal(ks[5], (1, OUT_F), jnp.float32) * scale,
        # conv1/conv2 (kernel_size=1) weights stored pre-transposed: [in, out]
        "w1":      jax.random.normal(ks[6], (OUT_F, FF), jnp.float32) * scale,
        "b1":      jax.random.normal(ks[7], (1, FF), jnp.float32) * scale,
        "w2":      jax.random.normal(ks[8], (FF, OUT_F), jnp.float32) * scale,
        "b2":      jax.random.normal(ks[9], (1, OUT_F), jnp.float32) * scale,
        "gamma":   jnp.ones((1, OUT_F), jnp.float32),   # LayerNorm default init
        "beta":    jnp.zeros((1, OUT_F), jnp.float32),
    }

    x = jax.random.normal(ks[10], (B, N, IN_F), jnp.float32)
    adj = (jax.random.uniform(ks[11], (N, N)) > 0.5).astype(jnp.float32)
    adj = jnp.maximum(adj, jnp.eye(N, dtype=jnp.float32))   # self loops (no isolated nodes)

    out = graph_encoder_layer(x, adj, params, alpha=ALPHA)
    out = jax.block_until_ready(out)

    ref = ref_forward(x, adj, params, ALPHA)
    assert out.shape == (B, N, OUT_F)
    # bf16 MXU operands (f32 accumulation) -> compare at bf16-level tolerance vs. the f32 reference.
    assert jnp.allclose(out, ref, rtol=3e-2, atol=3e-2), "kernel/reference mismatch"

    print("KERNEL_OK")
</pallas_src>

<mosaic_0001>
module attributes {stable_mosaic.version = 11 : i64} {
  func.func @_fused_kernel(%arg0: i32, %arg1: memref<2x8x16xbf16, #tpu.memory_space<vmem>>, %arg2: memref<8x8xi8, #tpu.memory_space<vmem>>, %arg3: memref<16x128xbf16, #tpu.memory_space<vmem>>, %arg4: memref<128x4xbf16, #tpu.memory_space<vmem>>, %arg5: memref<4x128xbf16, #tpu.memory_space<vmem>>, %arg6: memref<128x16xbf16, #tpu.memory_space<vmem>>, %arg7: memref<16x1xbf16, #tpu.memory_space<vmem>>, %arg8: memref<1x16xbf16, #tpu.memory_space<vmem>>, %arg9: memref<16x32xbf16, #tpu.memory_space<vmem>>, %arg10: memref<1x32xf32, #tpu.memory_space<vmem>>, %arg11: memref<32x16xbf16, #tpu.memory_space<vmem>>, %arg12: memref<1x16xf32, #tpu.memory_space<vmem>>, %arg13: memref<1x16xf32, #tpu.memory_space<vmem>>, %arg14: memref<1x16xf32, #tpu.memory_space<vmem>>, %arg15: memref<2x8x16xf32, #tpu.memory_space<vmem>>) attributes {dimension_semantics = [#tpu.dimension_semantics<parallel>], iteration_bounds = array<i64: 1>, scalar_prefetch = 0 : i64, scratch_operands = 0 : i64, tpu.core_type = #tpu.core_type<tc>, window_params = [{transform_indices = @transform_0, window_bounds = array<i64: 2, 8, 16>}, {pipeline_mode = #tpu.pipeline_mode<synchronous>, transform_indices = @transform_1, window_bounds = array<i64: 8, 8>}, {pipeline_mode = #tpu.pipeline_mode<synchronous>, transform_indices = @transform_2, window_bounds = array<i64: 16, 128>}, {pipeline_mode = #tpu.pipeline_mode<synchronous>, transform_indices = @transform_3, window_bounds = array<i64: 128, 4>}, {pipeline_mode = #tpu.pipeline_mode<synchronous>, transform_indices = @transform_4, window_bounds = array<i64: 4, 128>}, {pipeline_mode = #tpu.pipeline_mode<synchronous>, transform_indices = @transform_5, window_bounds = array<i64: 128, 16>}, {pipeline_mode = #tpu.pipeline_mode<synchronous>, transform_indices = @transform_6, window_bounds = array<i64: 16, 1>}, {pipeline_mode = #tpu.pipeline_mode<synchronous>, transform_indices = @transform_7, window_bounds = array<i64: 1, 16>}, {pipeline_mode = #tpu.pipeline_mode<synchronous>, transform_indices = @transform_8, window_bounds = array<i64: 16, 32>}, {pipeline_mode = #tpu.pipeline_mode<synchronous>, transform_indices = @transform_9, window_bounds = array<i64: 1, 32>}, {pipeline_mode = #tpu.pipeline_mode<synchronous>, transform_indices = @transform_10, window_bounds = array<i64: 32, 16>}, {pipeline_mode = #tpu.pipeline_mode<synchronous>, transform_indices = @transform_11, window_bounds = array<i64: 1, 16>}, {pipeline_mode = #tpu.pipeline_mode<synchronous>, transform_indices = @transform_12, window_bounds = array<i64: 1, 16>}, {pipeline_mode = #tpu.pipeline_mode<synchronous>, transform_indices = @transform_13, window_bounds = array<i64: 1, 16>}, {transform_indices = @transform_14, window_bounds = array<i64: 2, 8, 16>}]} {
    %c0 = arith.constant 0 : index
    %c0_0 = arith.constant 0 : index
    %c0_1 = arith.constant 0 : index
    %0 = vector.load %arg1[%c0, %c0_0, %c0_1] : memref<2x8x16xbf16, #tpu.memory_space<vmem>>, vector<2x8x16xbf16>
    %1 = vector.shape_cast %0 : vector<2x8x16xbf16> to vector<16x16xbf16>
    %c0_2 = arith.constant 0 : index
    %c0_3 = arith.constant 0 : index
    %2 = vector.load %arg2[%c0_2, %c0_3] : memref<8x8xi8, #tpu.memory_space<vmem>>, vector<8x8xi8>
    %3 = arith.sitofp %2 : vector<8x8xi8> to vector<8x8xf32>
    %cst = arith.constant 0.000000e+00 : f32
    %4 = vector.broadcast %cst : f32 to vector<8x8xf32>
    %5 = arith.cmpf ogt, %3, %4 : vector<8x8xf32>
    %c0_4 = arith.constant 0 : index
    %c0_5 = arith.constant 0 : index
    %6 = vector.load %arg3[%c0_4, %c0_5] : memref<16x128xbf16, #tpu.memory_space<vmem>>, vector<16x128xbf16>
    %cst_6 = arith.constant dense<0.000000e+00> : vector<16x128xf32>
    %7 = tpu.matmul %1, %6, %cst_6 {dimension_numbers = #tpu.dot_dimension_numbers<[1], [0], [0], [1], [0, 0, 1, 1], [], []>} : vector<16x16xbf16>, vector<16x128xbf16>, vector<16x128xf32> -> vector<16x128xf32>
    %8 = arith.truncf %7 : vector<16x128xf32> to vector<16x128xbf16>
    %c0_7 = arith.constant 0 : index
    %c0_8 = arith.constant 0 : index
    %9 = vector.load %arg4[%c0_7, %c0_8] : memref<128x4xbf16, #tpu.memory_space<vmem>>, vector<128x4xbf16>
    %cst_9 = arith.constant dense<0.000000e+00> : vector<16x4xf32>
    %10 = tpu.matmul %8, %9, %cst_9 {dimension_numbers = #tpu.dot_dimension_numbers<[1], [0], [0], [1], [0, 0, 1, 1], [], []>} : vector<16x128xbf16>, vector<128x4xbf16>, vector<16x4xf32> -> vector<16x4xf32>
    %c0_10 = arith.constant 0 : index
    %c0_11 = arith.constant 0 : index
    %11 = vector.load %arg5[%c0_10, %c0_11] : memref<4x128xbf16, #tpu.memory_space<vmem>>, vector<4x128xbf16>
    %cst_12 = arith.constant dense<0.000000e+00> : vector<4x16xf32>
    %12 = tpu.matmul %11, %8, %cst_12 {dimension_numbers = #tpu.dot_dimension_numbers<[1], [1], [0], [0], [0, 0, 1, 0], [], []>} : vector<4x128xbf16>, vector<16x128xbf16>, vector<4x16xf32> -> vector<4x16xf32>
    %13 = vector.extract_strided_slice %8 {offsets = [0, 0], sizes = [8, 32], strides = [1, 1]} : vector<16x128xbf16> to vector<8x32xbf16>
    %14 = vector.extract_strided_slice %10 {offsets = [0, 0], sizes = [8, 1], strides = [1, 1]} : vector<16x4xf32> to vector<8x1xf32>
    %15 = vector.extract_strided_slice %12 {offsets = [0, 0], sizes = [1, 8], strides = [1, 1]} : vector<4x16xf32> to vector<1x8xf32>
    %16 = vector.broadcast %14 : vector<8x1xf32> to vector<8x8xf32>
    %17 = vector.broadcast %15 : vector<1x8xf32> to vector<8x8xf32>
    %18 = arith.addf %16, %17 : vector<8x8xf32>
    %cst_13 = arith.constant 0.000000e+00 : f32
    %19 = vector.broadcast %cst_13 : f32 to vector<8x8xf32>
    %20 = arith.cmpf ogt, %18, %19 : vector<8x8xf32>
    %cst_14 = arith.constant 0.00999999977 : f32
    %21 = vector.broadcast %cst_14 : f32 to vector<8x8xf32>
    %22 = arith.mulf %21, %18 : vector<8x8xf32>
    %23 = arith.select %20, %18, %22 : vector<8x8xi1>, vector<8x8xf32>
    %cst_15 = arith.constant -9.000000e+15 : f32
    %24 = vector.broadcast %cst_15 : f32 to vector<8x8xf32>
    %25 = arith.select %5, %23, %24 : vector<8x8xi1>, vector<8x8xf32>
    %cst_16 = arith.constant dense<0xFF800000> : vector<8xf32>
    %26 = vector.multi_reduction <maximumf>, %25, %cst_16 [1] : vector<8x8xf32> to vector<8xf32>
    %27 = vector.shape_cast %26 : vector<8xf32> to vector<8x1xf32>
    %28 = vector.broadcast %27 : vector<8x1xf32> to vector<8x8xf32>
    %29 = arith.subf %25, %28 : vector<8x8xf32>
    %30 = math.exp %29 : vector<8x8xf32>
    %cst_17 = arith.constant dense<0.000000e+00> : vector<8xf32>
    %31 = vector.multi_reduction <add>, %30, %cst_17 [1] : vector<8x8xf32> to vector<8xf32>
    %32 = vector.shape_cast %31 : vector<8xf32> to vector<8x1xf32>
    %33 = tpu.reciprocal %32 {approx = true} : vector<8x1xf32> -> vector<8x1xf32>
    %34 = vector.broadcast %33 : vector<8x1xf32> to vector<8x8xf32>
    %35 = arith.mulf %30, %34 : vector<8x8xf32>
    %36 = arith.truncf %35 : vector<8x8xf32> to vector<8x8xbf16>
    %cst_18 = arith.constant dense<0.000000e+00> : vector<8x32xf32>
    %37 = tpu.matmul %36, %13, %cst_18 {dimension_numbers = #tpu.dot_dimension_numbers<[1], [0], [0], [1], [0, 0, 1, 1], [], []>} : vector<8x8xbf16>, vector<8x32xbf16>, vector<8x32xf32> -> vector<8x32xf32>
    %cst_19 = arith.constant 0.000000e+00 : f32
    %38 = vector.broadcast %cst_19 : f32 to vector<8x32xf32>
    %39 = arith.cmpf ogt, %37, %38 : vector<8x32xf32>
    %cst_20 = arith.constant 0.000000e+00 : f32
    %40 = vector.broadcast %cst_20 : f32 to vector<8x32xf32>
    %41 = arith.minimumf %37, %40 : vector<8x32xf32>
    %42 = math.exp %41 : vector<8x32xf32>
    %cst_21 = arith.constant 1.000000e+00 : f32
    %43 = vector.broadcast %cst_21 : f32 to vector<8x32xf32>
    %44 = arith.subf %42, %43 : vector<8x32xf32>
    %45 = arith.select %39, %37, %44 : vector<8x32xi1>, vector<8x32xf32>
    %46 = vector.extract_strided_slice %8 {offsets = [0, 32], sizes = [8, 32], strides = [1, 1]} : vector<16x128xbf16> to vector<8x32xbf16>
    %47 = vector.extract_strided_slice %10 {offsets = [0, 1], sizes = [8, 1], strides = [1, 1]} : vector<16x4xf32> to vector<8x1xf32>
    %48 = vector.extract_strided_slice %12 {offsets = [1, 0], sizes = [1, 8], strides = [1, 1]} : vector<4x16xf32> to vector<1x8xf32>
    %49 = vector.broadcast %47 : vector<8x1xf32> to vector<8x8xf32>
    %50 = vector.broadcast %48 : vector<1x8xf32> to vector<8x8xf32>
    %51 = arith.addf %49, %50 : vector<8x8xf32>
    %cst_22 = arith.constant 0.000000e+00 : f32
    %52 = vector.broadcast %cst_22 : f32 to vector<8x8xf32>
    %53 = arith.cmpf ogt, %51, %52 : vector<8x8xf32>
    %cst_23 = arith.constant 0.00999999977 : f32
    %54 = vector.broadcast %cst_23 : f32 to vector<8x8xf32>
    %55 = arith.mulf %54, %51 : vector<8x8xf32>
    %56 = arith.select %53, %51, %55 : vector<8x8xi1>, vector<8x8xf32>
    %cst_24 = arith.constant -9.000000e+15 : f32
    %57 = vector.broadcast %cst_24 : f32 to vector<8x8xf32>
    %58 = arith.select %5, %56, %57 : vector<8x8xi1>, vector<8x8xf32>
    %cst_25 = arith.constant dense<0xFF800000> : vector<8xf32>
    %59 = vector.multi_reduction <maximumf>, %58, %cst_25 [1] : vector<8x8xf32> to vector<8xf32>
    %60 = vector.shape_cast %59 : vector<8xf32> to vector<8x1xf32>
    %61 = vector.broadcast %60 : vector<8x1xf32> to vector<8x8xf32>
    %62 = arith.subf %58, %61 : vector<8x8xf32>
    %63 = math.exp %62 : vector<8x8xf32>
    %cst_26 = arith.constant dense<0.000000e+00> : vector<8xf32>
    %64 = vector.multi_reduction <add>, %63, %cst_26 [1] : vector<8x8xf32> to vector<8xf32>
    %65 = vector.shape_cast %64 : vector<8xf32> to vector<8x1xf32>
    %66 = tpu.reciprocal %65 {approx = true} : vector<8x1xf32> -> vector<8x1xf32>
    %67 = vector.broadcast %66 : vector<8x1xf32> to vector<8x8xf32>
    %68 = arith.mulf %63, %67 : vector<8x8xf32>
    %69 = arith.truncf %68 : vector<8x8xf32> to vector<8x8xbf16>
    %cst_27 = arith.constant dense<0.000000e+00> : vector<8x32xf32>
    %70 = tpu.matmul %69, %46, %cst_27 {dimension_numbers = #tpu.dot_dimension_numbers<[1], [0], [0], [1], [0, 0, 1, 1], [], []>} : vector<8x8xbf16>, vector<8x32xbf16>, vector<8x32xf32> -> vector<8x32xf32>
    %cst_28 = arith.constant 0.000000e+00 : f32
    %71 = vector.broadcast %cst_28 : f32 to vector<8x32xf32>
    %72 = arith.cmpf ogt, %70, %71 : vector<8x32xf32>
    %cst_29 = arith.constant 0.000000e+00 : f32
    %73 = vector.broadcast %cst_29 : f32 to vector<8x32xf32>
    %74 = arith.minimumf %70, %73 : vector<8x32xf32>
    %75 = math.exp %74 : vector<8x32xf32>
    %cst_30 = arith.constant 1.000000e+00 : f32
    %76 = vector.broadcast %cst_30 : f32 to vector<8x32xf32>
    %77 = arith.subf %75, %76 : vector<8x32xf32>
    %78 = arith.select %72, %70, %77 : vector<8x32xi1>, vector<8x32xf32>
    %79 = vector.extract_strided_slice %8 {offsets = [0, 64], sizes = [8, 32], strides = [1, 1]} : vector<16x128xbf16> to vector<8x32xbf16>
    %80 = vector.extract_strided_slice %10 {offsets = [0, 2], sizes = [8, 1], strides = [1, 1]} : vector<16x4xf32> to vector<8x1xf32>
    %81 = vector.extract_strided_slice %12 {offsets = [2, 0], sizes = [1, 8], strides = [1, 1]} : vector<4x16xf32> to vector<1x8xf32>
    %82 = vector.broadcast %80 : vector<8x1xf32> to vector<8x8xf32>
    %83 = vector.broadcast %81 : vector<1x8xf32> to vector<8x8xf32>
    %84 = arith.addf %82, %83 : vector<8x8xf32>
    %cst_31 = arith.constant 0.000000e+00 : f32
    %85 = vector.broadcast %cst_31 : f32 to vector<8x8xf32>
    %86 = arith.cmpf ogt, %84, %85 : vector<8x8xf32>
    %cst_32 = arith.constant 0.00999999977 : f32
    %87 = vector.broadcast %cst_32 : f32 to vector<8x8xf32>
    %88 = arith.mulf %87, %84 : vector<8x8xf32>
    %89 = arith.select %86, %84, %88 : vector<8x8xi1>, vector<8x8xf32>
    %cst_33 = arith.constant -9.000000e+15 : f32
    %90 = vector.broadcast %cst_33 : f32 to vector<8x8xf32>
    %91 = arith.select %5, %89, %90 : vector<8x8xi1>, vector<8x8xf32>
    %cst_34 = arith.constant dense<0xFF800000> : vector<8xf32>
    %92 = vector.multi_reduction <maximumf>, %91, %cst_34 [1] : vector<8x8xf32> to vector<8xf32>
    %93 = vector.shape_cast %92 : vector<8xf32> to vector<8x1xf32>
    %94 = vector.broadcast %93 : vector<8x1xf32> to vector<8x8xf32>
    %95 = arith.subf %91, %94 : vector<8x8xf32>
    %96 = math.exp %95 : vector<8x8xf32>
    %cst_35 = arith.constant dense<0.000000e+00> : vector<8xf32>
    %97 = vector.multi_reduction <add>, %96, %cst_35 [1] : vector<8x8xf32> to vector<8xf32>
    %98 = vector.shape_cast %97 : vector<8xf32> to vector<8x1xf32>
    %99 = tpu.reciprocal %98 {approx = true} : vector<8x1xf32> -> vector<8x1xf32>
    %100 = vector.broadcast %99 : vector<8x1xf32> to vector<8x8xf32>
    %101 = arith.mulf %96, %100 : vector<8x8xf32>
    %102 = arith.truncf %101 : vector<8x8xf32> to vector<8x8xbf16>
    %cst_36 = arith.constant dense<0.000000e+00> : vector<8x32xf32>
    %103 = tpu.matmul %102, %79, %cst_36 {dimension_numbers = #tpu.dot_dimension_numbers<[1], [0], [0], [1], [0, 0, 1, 1], [], []>} : vector<8x8xbf16>, vector<8x32xbf16>, vector<8x32xf32> -> vector<8x32xf32>
    %cst_37 = arith.constant 0.000000e+00 : f32
    %104 = vector.broadcast %cst_37 : f32 to vector<8x32xf32>
    %105 = arith.cmpf ogt, %103, %104 : vector<8x32xf32>
    %cst_38 = arith.constant 0.000000e+00 : f32
    %106 = vector.broadcast %cst_38 : f32 to vector<8x32xf32>
    %107 = arith.minimumf %103, %106 : vector<8x32xf32>
    %108 = math.exp %107 : vector<8x32xf32>
    %cst_39 = arith.constant 1.000000e+00 : f32
    %109 = vector.broadcast %cst_39 : f32 to vector<8x32xf32>
    %110 = arith.subf %108, %109 : vector<8x32xf32>
    %111 = arith.select %105, %103, %110 : vector<8x32xi1>, vector<8x32xf32>
    %112 = vector.extract_strided_slice %8 {offsets = [0, 96], sizes = [8, 32], strides = [1, 1]} : vector<16x128xbf16> to vector<8x32xbf16>
    %113 = vector.extract_strided_slice %10 {offsets = [0, 3], sizes = [8, 1], strides = [1, 1]} : vector<16x4xf32> to vector<8x1xf32>
    %114 = vector.extract_strided_slice %12 {offsets = [3, 0], sizes = [1, 8], strides = [1, 1]} : vector<4x16xf32> to vector<1x8xf32>
    %115 = vector.broadcast %113 : vector<8x1xf32> to vector<8x8xf32>
    %116 = vector.broadcast %114 : vector<1x8xf32> to vector<8x8xf32>
    %117 = arith.addf %115, %116 : vector<8x8xf32>
    %cst_40 = arith.constant 0.000000e+00 : f32
    %118 = vector.broadcast %cst_40 : f32 to vector<8x8xf32>
    %119 = arith.cmpf ogt, %117, %118 : vector<8x8xf32>
    %cst_41 = arith.constant 0.00999999977 : f32
    %120 = vector.broadcast %cst_41 : f32 to vector<8x8xf32>
    %121 = arith.mulf %120, %117 : vector<8x8xf32>
    %122 = arith.select %119, %117, %121 : vector<8x8xi1>, vector<8x8xf32>
    %cst_42 = arith.constant -9.000000e+15 : f32
    %123 = vector.broadcast %cst_42 : f32 to vector<8x8xf32>
    %124 = arith.select %5, %122, %123 : vector<8x8xi1>, vector<8x8xf32>
    %cst_43 = arith.constant dense<0xFF800000> : vector<8xf32>
    %125 = vector.multi_reduction <maximumf>, %124, %cst_43 [1] : vector<8x8xf32> to vector<8xf32>
    %126 = vector.shape_cast %125 : vector<8xf32> to vector<8x1xf32>
    %127 = vector.broadcast %126 : vector<8x1xf32> to vector<8x8xf32>
    %128 = arith.subf %124, %127 : vector<8x8xf32>
    %129 = math.exp %128 : vector<8x8xf32>
    %cst_44 = arith.constant dense<0.000000e+00> : vector<8xf32>
    %130 = vector.multi_reduction <add>, %129, %cst_44 [1] : vector<8x8xf32> to vector<8xf32>
    %131 = vector.shape_cast %130 : vector<8xf32> to vector<8x1xf32>
    %132 = tpu.reciprocal %131 {approx = true} : vector<8x1xf32> -> vector<8x1xf32>
    %133 = vector.broadcast %132 : vector<8x1xf32> to vector<8x8xf32>
    %134 = arith.mulf %129, %133 : vector<8x8xf32>
    %135 = arith.truncf %134 : vector<8x8xf32> to vector<8x8xbf16>
    %cst_45 = arith.constant dense<0.000000e+00> : vector<8x32xf32>
    %136 = tpu.matmul %135, %112, %cst_45 {dimension_numbers = #tpu.dot_dimension_numbers<[1], [0], [0], [1], [0, 0, 1, 1], [], []>} : vector<8x8xbf16>, vector<8x32xbf16>, vector<8x32xf32> -> vector<8x32xf32>
    %cst_46 = arith.constant 0.000000e+00 : f32
    %137 = vector.broadcast %cst_46 : f32 to vector<8x32xf32>
    %138 = arith.cmpf ogt, %136, %137 : vector<8x32xf32>
    %cst_47 = arith.constant 0.000000e+00 : f32
    %139 = vector.broadcast %cst_47 : f32 to vector<8x32xf32>
    %140 = arith.minimumf %136, %139 : vector<8x32xf32>
    %141 = math.exp %140 : vector<8x32xf32>
    %cst_48 = arith.constant 1.000000e+00 : f32
    %142 = vector.broadcast %cst_48 : f32 to vector<8x32xf32>
    %143 = arith.subf %141, %142 : vector<8x32xf32>
    %144 = arith.select %138, %136, %143 : vector<8x32xi1>, vector<8x32xf32>
    %145 = tpu.concatenate %45, %78, %111, %144 in 1 : vector<8x32xf32>, vector<8x32xf32>, vector<8x32xf32>, vector<8x32xf32> -> vector<8x128xf32>
    %146 = vector.extract_strided_slice %8 {offsets = [8, 0], sizes = [8, 32], strides = [1, 1]} : vector<16x128xbf16> to vector<8x32xbf16>
    %147 = vector.extract_strided_slice %10 {offsets = [8, 0], sizes = [8, 1], strides = [1, 1]} : vector<16x4xf32> to vector<8x1xf32>
    %148 = vector.extract_strided_slice %12 {offsets = [0, 8], sizes = [1, 8], strides = [1, 1]} : vector<4x16xf32> to vector<1x8xf32>
    %149 = vector.broadcast %147 : vector<8x1xf32> to vector<8x8xf32>
    %150 = vector.broadcast %148 : vector<1x8xf32> to vector<8x8xf32>
    %151 = arith.addf %149, %150 : vector<8x8xf32>
    %cst_49 = arith.constant 0.000000e+00 : f32
    %152 = vector.broadcast %cst_49 : f32 to vector<8x8xf32>
    %153 = arith.cmpf ogt, %151, %152 : vector<8x8xf32>
    %cst_50 = arith.constant 0.00999999977 : f32
    %154 = vector.broadcast %cst_50 : f32 to vector<8x8xf32>
    %155 = arith.mulf %154, %151 : vector<8x8xf32>
    %156 = arith.select %153, %151, %155 : vector<8x8xi1>, vector<8x8xf32>
    %cst_51 = arith.constant -9.000000e+15 : f32
    %157 = vector.broadcast %cst_51 : f32 to vector<8x8xf32>
    %158 = arith.select %5, %156, %157 : vector<8x8xi1>, vector<8x8xf32>
    %cst_52 = arith.constant dense<0xFF800000> : vector<8xf32>
    %159 = vector.multi_reduction <maximumf>, %158, %cst_52 [1] : vector<8x8xf32> to vector<8xf32>
    %160 = vector.shape_cast %159 : vector<8xf32> to vector<8x1xf32>
    %161 = vector.broadcast %160 : vector<8x1xf32> to vector<8x8xf32>
    %162 = arith.subf %158, %161 : vector<8x8xf32>
    %163 = math.exp %162 : vector<8x8xf32>
    %cst_53 = arith.constant dense<0.000000e+00> : vector<8xf32>
    %164 = vector.multi_reduction <add>, %163, %cst_53 [1] : vector<8x8xf32> to vector<8xf32>
    %165 = vector.shape_cast %164 : vector<8xf32> to vector<8x1xf32>
    %166 = tpu.reciprocal %165 {approx = true} : vector<8x1xf32> -> vector<8x1xf32>
    %167 = vector.broadcast %166 : vector<8x1xf32> to vector<8x8xf32>
    %168 = arith.mulf %163, %167 : vector<8x8xf32>
    %169 = arith.truncf %168 : vector<8x8xf32> to vector<8x8xbf16>
    %cst_54 = arith.constant dense<0.000000e+00> : vector<8x32xf32>
    %170 = tpu.matmul %169, %146, %cst_54 {dimension_numbers = #tpu.dot_dimension_numbers<[1], [0], [0], [1], [0, 0, 1, 1], [], []>} : vector<8x8xbf16>, vector<8x32xbf16>, vector<8x32xf32> -> vector<8x32xf32>
    %cst_55 = arith.constant 0.000000e+00 : f32
    %171 = vector.broadcast %cst_55 : f32 to vector<8x32xf32>
    %172 = arith.cmpf ogt, %170, %171 : vector<8x32xf32>
    %cst_56 = arith.constant 0.000000e+00 : f32
    %173 = vector.broadcast %cst_56 : f32 to vector<8x32xf32>
    %174 = arith.minimumf %170, %173 : vector<8x32xf32>
    %175 = math.exp %174 : vector<8x32xf32>
    %cst_57 = arith.constant 1.000000e+00 : f32
    %176 = vector.broadcast %cst_57 : f32 to vector<8x32xf32>
    %177 = arith.subf %175, %176 : vector<8x32xf32>
    %178 = arith.select %172, %170, %177 : vector<8x32xi1>, vector<8x32xf32>
    %179 = vector.extract_strided_slice %8 {offsets = [8, 32], sizes = [8, 32], strides = [1, 1]} : vector<16x128xbf16> to vector<8x32xbf16>
    %180 = vector.extract_strided_slice %10 {offsets = [8, 1], sizes = [8, 1], strides = [1, 1]} : vector<16x4xf32> to vector<8x1xf32>
    %181 = vector.extract_strided_slice %12 {offsets = [1, 8], sizes = [1, 8], strides = [1, 1]} : vector<4x16xf32> to vector<1x8xf32>
    %182 = vector.broadcast %180 : vector<8x1xf32> to vector<8x8xf32>
    %183 = vector.broadcast %181 : vector<1x8xf32> to vector<8x8xf32>
    %184 = arith.addf %182, %183 : vector<8x8xf32>
    %cst_58 = arith.constant 0.000000e+00 : f32
    %185 = vector.broadcast %cst_58 : f32 to vector<8x8xf32>
    %186 = arith.cmpf ogt, %184, %185 : vector<8x8xf32>
    %cst_59 = arith.constant 0.00999999977 : f32
    %187 = vector.broadcast %cst_59 : f32 to vector<8x8xf32>
    %188 = arith.mulf %187, %184 : vector<8x8xf32>
    %189 = arith.select %186, %184, %188 : vector<8x8xi1>, vector<8x8xf32>
    %cst_60 = arith.constant -9.000000e+15 : f32
    %190 = vector.broadcast %cst_60 : f32 to vector<8x8xf32>
    %191 = arith.select %5, %189, %190 : vector<8x8xi1>, vector<8x8xf32>
    %cst_61 = arith.constant dense<0xFF800000> : vector<8xf32>
    %192 = vector.multi_reduction <maximumf>, %191, %cst_61 [1] : vector<8x8xf32> to vector<8xf32>
    %193 = vector.shape_cast %192 : vector<8xf32> to vector<8x1xf32>
    %194 = vector.broadcast %193 : vector<8x1xf32> to vector<8x8xf32>
    %195 = arith.subf %191, %194 : vector<8x8xf32>
    %196 = math.exp %195 : vector<8x8xf32>
    %cst_62 = arith.constant dense<0.000000e+00> : vector<8xf32>
    %197 = vector.multi_reduction <add>, %196, %cst_62 [1] : vector<8x8xf32> to vector<8xf32>
    %198 = vector.shape_cast %197 : vector<8xf32> to vector<8x1xf32>
    %199 = tpu.reciprocal %198 {approx = true} : vector<8x1xf32> -> vector<8x1xf32>
    %200 = vector.broadcast %199 : vector<8x1xf32> to vector<8x8xf32>
    %201 = arith.mulf %196, %200 : vector<8x8xf32>
    %202 = arith.truncf %201 : vector<8x8xf32> to vector<8x8xbf16>
    %cst_63 = arith.constant dense<0.000000e+00> : vector<8x32xf32>
    %203 = tpu.matmul %202, %179, %cst_63 {dimension_numbers = #tpu.dot_dimension_numbers<[1], [0], [0], [1], [0, 0, 1, 1], [], []>} : vector<8x8xbf16>, vector<8x32xbf16>, vector<8x32xf32> -> vector<8x32xf32>
    %cst_64 = arith.constant 0.000000e+00 : f32
    %204 = vector.broadcast %cst_64 : f32 to vector<8x32xf32>
    %205 = arith.cmpf ogt, %203, %204 : vector<8x32xf32>
    %cst_65 = arith.constant 0.000000e+00 : f32
    %206 = vector.broadcast %cst_65 : f32 to vector<8x32xf32>
    %207 = arith.minimumf %203, %206 : vector<8x32xf32>
    %208 = math.exp %207 : vector<8x32xf32>
    %cst_66 = arith.constant 1.000000e+00 : f32
    %209 = vector.broadcast %cst_66 : f32 to vector<8x32xf32>
    %210 = arith.subf %208, %209 : vector<8x32xf32>
    %211 = arith.select %205, %203, %210 : vector<8x32xi1>, vector<8x32xf32>
    %212 = vector.extract_strided_slice %8 {offsets = [8, 64], sizes = [8, 32], strides = [1, 1]} : vector<16x128xbf16> to vector<8x32xbf16>
    %213 = vector.extract_strided_slice %10 {offsets = [8, 2], sizes = [8, 1], strides = [1, 1]} : vector<16x4xf32> to vector<8x1xf32>
    %214 = vector.extract_strided_slice %12 {offsets = [2, 8], sizes = [1, 8], strides = [1, 1]} : vector<4x16xf32> to vector<1x8xf32>
    %215 = vector.broadcast %213 : vector<8x1xf32> to vector<8x8xf32>
    %216 = vector.broadcast %214 : vector<1x8xf32> to vector<8x8xf32>
    %217 = arith.addf %215, %216 : vector<8x8xf32>
    %cst_67 = arith.constant 0.000000e+00 : f32
    %218 = vector.broadcast %cst_67 : f32 to vector<8x8xf32>
    %219 = arith.cmpf ogt, %217, %218 : vector<8x8xf32>
    %cst_68 = arith.constant 0.00999999977 : f32
    %220 = vector.broadcast %cst_68 : f32 to vector<8x8xf32>
    %221 = arith.mulf %220, %217 : vector<8x8xf32>
    %222 = arith.select %219, %217, %221 : vector<8x8xi1>, vector<8x8xf32>
    %cst_69 = arith.constant -9.000000e+15 : f32
    %223 = vector.broadcast %cst_69 : f32 to vector<8x8xf32>
    %224 = arith.select %5, %222, %223 : vector<8x8xi1>, vector<8x8xf32>
    %cst_70 = arith.constant dense<0xFF800000> : vector<8xf32>
    %225 = vector.multi_reduction <maximumf>, %224, %cst_70 [1] : vector<8x8xf32> to vector<8xf32>
    %226 = vector.shape_cast %225 : vector<8xf32> to vector<8x1xf32>
    %227 = vector.broadcast %226 : vector<8x1xf32> to vector<8x8xf32>
    %228 = arith.subf %224, %227 : vector<8x8xf32>
    %229 = math.exp %228 : vector<8x8xf32>
    %cst_71 = arith.constant dense<0.000000e+00> : vector<8xf32>
    %230 = vector.multi_reduction <add>, %229, %cst_71 [1] : vector<8x8xf32> to vector<8xf32>
    %231 = vector.shape_cast %230 : vector<8xf32> to vector<8x1xf32>
    %232 = tpu.reciprocal %231 {approx = true} : vector<8x1xf32> -> vector<8x1xf32>
    %233 = vector.broadcast %232 : vector<8x1xf32> to vector<8x8xf32>
    %234 = arith.mulf %229, %233 : vector<8x8xf32>
    %235 = arith.truncf %234 : vector<8x8xf32> to vector<8x8xbf16>
    %cst_72 = arith.constant dense<0.000000e+00> : vector<8x32xf32>
    %236 = tpu.matmul %235, %212, %cst_72 {dimension_numbers = #tpu.dot_dimension_numbers<[1], [0], [0], [1], [0, 0, 1, 1], [], []>} : vector<8x8xbf16>, vector<8x32xbf16>, vector<8x32xf32> -> vector<8x32xf32>
    %cst_73 = arith.constant 0.000000e+00 : f32
    %237 = vector.broadcast %cst_73 : f32 to vector<8x32xf32>
    %238 = arith.cmpf ogt, %236, %237 : vector<8x32xf32>
    %cst_74 = arith.constant 0.000000e+00 : f32
    %239 = vector.broadcast %cst_74 : f32 to vector<8x32xf32>
    %240 = arith.minimumf %236, %239 : vector<8x32xf32>
    %241 = math.exp %240 : vector<8x32xf32>
    %cst_75 = arith.constant 1.000000e+00 : f32
    %242 = vector.broadcast %cst_75 : f32 to vector<8x32xf32>
    %243 = arith.subf %241, %242 : vector<8x32xf32>
    %244 = arith.select %238, %236, %243 : vector<8x32xi1>, vector<8x32xf32>
    %245 = vector.extract_strided_slice %8 {offsets = [8, 96], sizes = [8, 32], strides = [1, 1]} : vector<16x128xbf16> to vector<8x32xbf16>
    %246 = vector.extract_strided_slice %10 {offsets = [8, 3], sizes = [8, 1], strides = [1, 1]} : vector<16x4xf32> to vector<8x1xf32>
    %247 = vector.extract_strided_slice %12 {offsets = [3, 8], sizes = [1, 8], strides = [1, 1]} : vector<4x16xf32> to vector<1x8xf32>
    %248 = vector.broadcast %246 : vector<8x1xf32> to vector<8x8xf32>
    %249 = vector.broadcast %247 : vector<1x8xf32> to vector<8x8xf32>
    %250 = arith.addf %248, %249 : vector<8x8xf32>
    %cst_76 = arith.constant 0.000000e+00 : f32
    %251 = vector.broadcast %cst_76 : f32 to vector<8x8xf32>
    %252 = arith.cmpf ogt, %250, %251 : vector<8x8xf32>
    %cst_77 = arith.constant 0.00999999977 : f32
    %253 = vector.broadcast %cst_77 : f32 to vector<8x8xf32>
    %254 = arith.mulf %253, %250 : vector<8x8xf32>
    %255 = arith.select %252, %250, %254 : vector<8x8xi1>, vector<8x8xf32>
    %cst_78 = arith.constant -9.000000e+15 : f32
    %256 = vector.broadcast %cst_78 : f32 to vector<8x8xf32>
    %257 = arith.select %5, %255, %256 : vector<8x8xi1>, vector<8x8xf32>
    %cst_79 = arith.constant dense<0xFF800000> : vector<8xf32>
    %258 = vector.multi_reduction <maximumf>, %257, %cst_79 [1] : vector<8x8xf32> to vector<8xf32>
    %259 = vector.shape_cast %258 : vector<8xf32> to vector<8x1xf32>
    %260 = vector.broadcast %259 : vector<8x1xf32> to vector<8x8xf32>
    %261 = arith.subf %257, %260 : vector<8x8xf32>
    %262 = math.exp %261 : vector<8x8xf32>
    %cst_80 = arith.constant dense<0.000000e+00> : vector<8xf32>
    %263 = vector.multi_reduction <add>, %262, %cst_80 [1] : vector<8x8xf32> to vector<8xf32>
    %264 = vector.shape_cast %263 : vector<8xf32> to vector<8x1xf32>
    %265 = tpu.reciprocal %264 {approx = true} : vector<8x1xf32> -> vector<8x1xf32>
    %266 = vector.broadcast %265 : vector<8x1xf32> to vector<8x8xf32>
    %267 = arith.mulf %262, %266 : vector<8x8xf32>
    %268 = arith.truncf %267 : vector<8x8xf32> to vector<8x8xbf16>
    %cst_81 = arith.constant dense<0.000000e+00> : vector<8x32xf32>
    %269 = tpu.matmul %268, %245, %cst_81 {dimension_numbers = #tpu.dot_dimension_numbers<[1], [0], [0], [1], [0, 0, 1, 1], [], []>} : vector<8x8xbf16>, vector<8x32xbf16>, vector<8x32xf32> -> vector<8x32xf32>
    %cst_82 = arith.constant 0.000000e+00 : f32
    %270 = vector.broadcast %cst_82 : f32 to vector<8x32xf32>
    %271 = arith.cmpf ogt, %269, %270 : vector<8x32xf32>
    %cst_83 = arith.constant 0.000000e+00 : f32
    %272 = vector.broadcast %cst_83 : f32 to vector<8x32xf32>
    %273 = arith.minimumf %269, %272 : vector<8x32xf32>
    %274 = math.exp %273 : vector<8x32xf32>
    %cst_84 = arith.constant 1.000000e+00 : f32
    %275 = vector.broadcast %cst_84 : f32 to vector<8x32xf32>
    %276 = arith.subf %274, %275 : vector<8x32xf32>
    %277 = arith.select %271, %269, %276 : vector<8x32xi1>, vector<8x32xf32>
    %278 = tpu.concatenate %178, %211, %244, %277 in 1 : vector<8x32xf32>, vector<8x32xf32>, vector<8x32xf32>, vector<8x32xf32> -> vector<8x128xf32>
    %279 = tpu.concatenate %145, %278 in 0 : vector<8x128xf32>, vector<8x128xf32> -> vector<16x128xf32>
    %280 = arith.truncf %279 : vector<16x128xf32> to vector<16x128xbf16>
    %c0_85 = arith.constant 0 : index
    %c0_86 = arith.constant 0 : index
    %281 = vector.load %arg6[%c0_85, %c0_86] : memref<128x16xbf16, #tpu.memory_space<vmem>>, vector<128x16xbf16>
    %cst_87 = arith.constant dense<0.000000e+00> : vector<16x16xf32>
    %282 = tpu.matmul %280, %281, %cst_87 {dimension_numbers = #tpu.dot_dimension_numbers<[1], [0], [0], [1], [0, 0, 1, 1], [], []>} : vector<16x128xbf16>, vector<128x16xbf16>, vector<16x16xf32> -> vector<16x16xf32>
    %283 = arith.truncf %282 : vector<16x16xf32> to vector<16x16xbf16>
    %c0_88 = arith.constant 0 : index
    %c0_89 = arith.constant 0 : index
    %284 = vector.load %arg7[%c0_88, %c0_89] : memref<16x1xbf16, #tpu.memory_space<vmem>>, vector<16x1xbf16>
    %cst_90 = arith.constant dense<0.000000e+00> : vector<16x1xf32>
    %285 = tpu.matmul %283, %284, %cst_90 {dimension_numbers = #tpu.dot_dimension_numbers<[1], [0], [0], [1], [0, 0, 1, 1], [], []>} : vector<16x16xbf16>, vector<16x1xbf16>, vector<16x1xf32> -> vector<16x1xf32>
    %c0_91 = arith.constant 0 : index
    %c0_92 = arith.constant 0 : index
    %286 = vector.load %arg8[%c0_91, %c0_92] : memref<1x16xbf16, #tpu.memory_space<vmem>>, vector<1x16xbf16>
    %cst_93 = arith.constant dense<0.000000e+00> : vector<1x16xf32>
    %287 = tpu.matmul %286, %283, %cst_93 {dimension_numbers = #tpu.dot_dimension_numbers<[1], [1], [0], [0], [0, 0, 1, 0], [], []>} : vector<1x16xbf16>, vector<16x16xbf16>, vector<1x16xf32> -> vector<1x16xf32>
    %288 = vector.extract_strided_slice %285 {offsets = [0, 0], sizes = [8, 1], strides = [1, 1]} : vector<16x1xf32> to vector<8x1xf32>
    %289 = vector.extract_strided_slice %287 {offsets = [0, 0], sizes = [1, 8], strides = [1, 1]} : vector<1x16xf32> to vector<1x8xf32>
    %290 = vector.broadcast %288 : vector<8x1xf32> to vector<8x8xf32>
    %291 = vector.broadcast %289 : vector<1x8xf32> to vector<8x8xf32>
    %292 = arith.addf %290, %291 : vector<8x8xf32>
    %cst_94 = arith.constant 0.000000e+00 : f32
    %293 = vector.broadcast %cst_94 : f32 to vector<8x8xf32>
    %294 = arith.cmpf ogt, %292, %293 : vector<8x8xf32>
    %cst_95 = arith.constant 0.00999999977 : f32
    %295 = vector.broadcast %cst_95 : f32 to vector<8x8xf32>
    %296 = arith.mulf %295, %292 : vector<8x8xf32>
    %297 = arith.select %294, %292, %296 : vector<8x8xi1>, vector<8x8xf32>
    %cst_96 = arith.constant -9.000000e+15 : f32
    %298 = vector.broadcast %cst_96 : f32 to vector<8x8xf32>
    %299 = arith.select %5, %297, %298 : vector<8x8xi1>, vector<8x8xf32>
    %cst_97 = arith.constant dense<0xFF800000> : vector<8xf32>
    %300 = vector.multi_reduction <maximumf>, %299, %cst_97 [1] : vector<8x8xf32> to vector<8xf32>
    %301 = vector.shape_cast %300 : vector<8xf32> to vector<8x1xf32>
    %302 = vector.broadcast %301 : vector<8x1xf32> to vector<8x8xf32>
    %303 = arith.subf %299, %302 : vector<8x8xf32>
    %304 = math.exp %303 : vector<8x8xf32>
    %cst_98 = arith.constant dense<0.000000e+00> : vector<8xf32>
    %305 = vector.multi_reduction <add>, %304, %cst_98 [1] : vector<8x8xf32> to vector<8xf32>
    %306 = vector.shape_cast %305 : vector<8xf32> to vector<8x1xf32>
    %307 = tpu.reciprocal %306 {approx = true} : vector<8x1xf32> -> vector<8x1xf32>
    %308 = vector.broadcast %307 : vector<8x1xf32> to vector<8x8xf32>
    %309 = arith.mulf %304, %308 : vector<8x8xf32>
    %310 = arith.truncf %309 : vector<8x8xf32> to vector<8x8xbf16>
    %311 = vector.extract_strided_slice %283 {offsets = [0, 0], sizes = [8, 16], strides = [1, 1]} : vector<16x16xbf16> to vector<8x16xbf16>
    %cst_99 = arith.constant dense<0.000000e+00> : vector<8x16xf32>
    %312 = tpu.matmul %310, %311, %cst_99 {dimension_numbers = #tpu.dot_dimension_numbers<[1], [0], [0], [1], [0, 0, 1, 1], [], []>} : vector<8x8xbf16>, vector<8x16xbf16>, vector<8x16xf32> -> vector<8x16xf32>
    %cst_100 = arith.constant 0.000000e+00 : f32
    %313 = vector.broadcast %cst_100 : f32 to vector<8x16xf32>
    %314 = arith.cmpf ogt, %312, %313 : vector<8x16xf32>
    %cst_101 = arith.constant 0.000000e+00 : f32
    %315 = vector.broadcast %cst_101 : f32 to vector<8x16xf32>
    %316 = arith.minimumf %312, %315 : vector<8x16xf32>
    %317 = math.exp %316 : vector<8x16xf32>
    %cst_102 = arith.constant 1.000000e+00 : f32
    %318 = vector.broadcast %cst_102 : f32 to vector<8x16xf32>
    %319 = arith.subf %317, %318 : vector<8x16xf32>
    %320 = arith.select %314, %312, %319 : vector<8x16xi1>, vector<8x16xf32>
    %321 = vector.extract_strided_slice %285 {offsets = [8, 0], sizes = [8, 1], strides = [1, 1]} : vector<16x1xf32> to vector<8x1xf32>
    %322 = vector.extract_strided_slice %287 {offsets = [0, 8], sizes = [1, 8], strides = [1, 1]} : vector<1x16xf32> to vector<1x8xf32>
    %323 = vector.broadcast %321 : vector<8x1xf32> to vector<8x8xf32>
    %324 = vector.broadcast %322 : vector<1x8xf32> to vector<8x8xf32>
    %325 = arith.addf %323, %324 : vector<8x8xf32>
    %cst_103 = arith.constant 0.000000e+00 : f32
    %326 = vector.broadcast %cst_103 : f32 to vector<8x8xf32>
    %327 = arith.cmpf ogt, %325, %326 : vector<8x8xf32>
    %cst_104 = arith.constant 0.00999999977 : f32
    %328 = vector.broadcast %cst_104 : f32 to vector<8x8xf32>
    %329 = arith.mulf %328, %325 : vector<8x8xf32>
    %330 = arith.select %327, %325, %329 : vector<8x8xi1>, vector<8x8xf32>
    %cst_105 = arith.constant -9.000000e+15 : f32
    %331 = vector.broadcast %cst_105 : f32 to vector<8x8xf32>
    %332 = arith.select %5, %330, %331 : vector<8x8xi1>, vector<8x8xf32>
    %cst_106 = arith.constant dense<0xFF800000> : vector<8xf32>
    %333 = vector.multi_reduction <maximumf>, %332, %cst_106 [1] : vector<8x8xf32> to vector<8xf32>
    %334 = vector.shape_cast %333 : vector<8xf32> to vector<8x1xf32>
    %335 = vector.broadcast %334 : vector<8x1xf32> to vector<8x8xf32>
    %336 = arith.subf %332, %335 : vector<8x8xf32>
    %337 = math.exp %336 : vector<8x8xf32>
    %cst_107 = arith.constant dense<0.000000e+00> : vector<8xf32>
    %338 = vector.multi_reduction <add>, %337, %cst_107 [1] : vector<8x8xf32> to vector<8xf32>
    %339 = vector.shape_cast %338 : vector<8xf32> to vector<8x1xf32>
    %340 = tpu.reciprocal %339 {approx = true} : vector<8x1xf32> -> vector<8x1xf32>
    %341 = vector.broadcast %340 : vector<8x1xf32> to vector<8x8xf32>
    %342 = arith.mulf %337, %341 : vector<8x8xf32>
    %343 = arith.truncf %342 : vector<8x8xf32> to vector<8x8xbf16>
    %344 = vector.extract_strided_slice %283 {offsets = [8, 0], sizes = [8, 16], strides = [1, 1]} : vector<16x16xbf16> to vector<8x16xbf16>
    %cst_108 = arith.constant dense<0.000000e+00> : vector<8x16xf32>
    %345 = tpu.matmul %343, %344, %cst_108 {dimension_numbers = #tpu.dot_dimension_numbers<[1], [0], [0], [1], [0, 0, 1, 1], [], []>} : vector<8x8xbf16>, vector<8x16xbf16>, vector<8x16xf32> -> vector<8x16xf32>
    %cst_109 = arith.constant 0.000000e+00 : f32
    %346 = vector.broadcast %cst_109 : f32 to vector<8x16xf32>
    %347 = arith.cmpf ogt, %345, %346 : vector<8x16xf32>
    %cst_110 = arith.constant 0.000000e+00 : f32
    %348 = vector.broadcast %cst_110 : f32 to vector<8x16xf32>
    %349 = arith.minimumf %345, %348 : vector<8x16xf32>
    %350 = math.exp %349 : vector<8x16xf32>
    %cst_111 = arith.constant 1.000000e+00 : f32
    %351 = vector.broadcast %cst_111 : f32 to vector<8x16xf32>
    %352 = arith.subf %350, %351 : vector<8x16xf32>
    %353 = arith.select %347, %345, %352 : vector<8x16xi1>, vector<8x16xf32>
    %354 = tpu.concatenate %320, %353 in 0 : vector<8x16xf32>, vector<8x16xf32> -> vector<16x16xf32>
    %355 = arith.truncf %354 : vector<16x16xf32> to vector<16x16xbf16>
    %c0_112 = arith.constant 0 : index
    %c0_113 = arith.constant 0 : index
    %356 = vector.load %arg9[%c0_112, %c0_113] : memref<16x32xbf16, #tpu.memory_space<vmem>>, vector<16x32xbf16>
    %cst_114 = arith.constant dense<0.000000e+00> : vector<16x32xf32>
    %357 = tpu.matmul %355, %356, %cst_114 {dimension_numbers = #tpu.dot_dimension_numbers<[1], [0], [0], [1], [0, 0, 1, 1], [], []>} : vector<16x16xbf16>, vector<16x32xbf16>, vector<16x32xf32> -> vector<16x32xf32>
    %c0_115 = arith.constant 0 : index
    %c0_116 = arith.constant 0 : index
    %358 = vector.load %arg10[%c0_115, %c0_116] : memref<1x32xf32, #tpu.memory_space<vmem>>, vector<1x32xf32>
    %359 = vector.broadcast %358 : vector<1x32xf32> to vector<16x32xf32>
    %360 = arith.addf %357, %359 : vector<16x32xf32>
    %cst_117 = arith.constant 0.000000e+00 : f32
    %361 = vector.broadcast %cst_117 : f32 to vector<16x32xf32>
    %362 = arith.maximumf %360, %361 : vector<16x32xf32>
    %363 = arith.truncf %362 : vector<16x32xf32> to vector<16x32xbf16>
    %c0_118 = arith.constant 0 : index
    %c0_119 = arith.constant 0 : index
    %364 = vector.load %arg11[%c0_118, %c0_119] : memref<32x16xbf16, #tpu.memory_space<vmem>>, vector<32x16xbf16>
    %cst_120 = arith.constant dense<0.000000e+00> : vector<16x16xf32>
    %365 = tpu.matmul %363, %364, %cst_120 {dimension_numbers = #tpu.dot_dimension_numbers<[1], [0], [0], [1], [0, 0, 1, 1], [], []>} : vector<16x32xbf16>, vector<32x16xbf16>, vector<16x16xf32> -> vector<16x16xf32>
    %c0_121 = arith.constant 0 : index
    %c0_122 = arith.constant 0 : index
    %366 = vector.load %arg12[%c0_121, %c0_122] : memref<1x16xf32, #tpu.memory_space<vmem>>, vector<1x16xf32>
    %367 = vector.broadcast %366 : vector<1x16xf32> to vector<16x16xf32>
    %368 = arith.addf %365, %367 : vector<16x16xf32>
    %369 = arith.addf %368, %354 : vector<16x16xf32>
    %cst_123 = arith.constant dense<0.000000e+00> : vector<16xf32>
    %370 = vector.multi_reduction <add>, %369, %cst_123 [1] : vector<16x16xf32> to vector<16xf32>
    %371 = vector.shape_cast %370 : vector<16xf32> to vector<16x1xf32>
    %cst_124 = arith.constant 1.600000e+01 : f32
    %372 = vector.broadcast %cst_124 : f32 to vector<16x1xf32>
    %373 = arith.divf %371, %372 : vector<16x1xf32>
    %374 = vector.broadcast %373 : vector<16x1xf32> to vector<16x16xf32>
    %375 = arith.subf %369, %374 : vector<16x16xf32>
    %376 = arith.mulf %375, %375 : vector<16x16xf32>
    %cst_125 = arith.constant dense<0.000000e+00> : vector<16xf32>
    %377 = vector.multi_reduction <add>, %376, %cst_125 [1] : vector<16x16xf32> to vector<16xf32>
    %378 = vector.shape_cast %377 : vector<16xf32> to vector<16x1xf32>
    %cst_126 = arith.constant 1.600000e+01 : f32
    %379 = vector.broadcast %cst_126 : f32 to vector<16x1xf32>
    %380 = arith.divf %378, %379 : vector<16x1xf32>
    %381 = vector.broadcast %373 : vector<16x1xf32> to vector<16x16xf32>
    %382 = arith.subf %369, %381 : vector<16x16xf32>
    %cst_127 = arith.constant 9.99999974E-6 : f32
    %383 = vector.broadcast %cst_127 : f32 to vector<16x1xf32>
    %384 = arith.addf %380, %383 : vector<16x1xf32>
    %385 = math.rsqrt %384 : vector<16x1xf32>
    %386 = vector.broadcast %385 : vector<16x1xf32> to vector<16x16xf32>
    %387 = arith.mulf %382, %386 : vector<16x16xf32>
    %c0_128 = arith.constant 0 : index
    %c0_129 = arith.constant 0 : index
    %388 = vector.load %arg13[%c0_128, %c0_129] : memref<1x16xf32, #tpu.memory_space<vmem>>, vector<1x16xf32>
    %389 = vector.broadcast %388 : vector<1x16xf32> to vector<16x16xf32>
    %390 = arith.mulf %387, %389 : vector<16x16xf32>
    %c0_130 = arith.constant 0 : index
    %c0_131 = arith.constant 0 : index
    %391 = vector.load %arg14[%c0_130, %c0_131] : memref<1x16xf32, #tpu.memory_space<vmem>>, vector<1x16xf32>
    %392 = vector.broadcast %391 : vector<1x16xf32> to vector<16x16xf32>
    %393 = arith.addf %390, %392 : vector<16x16xf32>
    %394 = vector.shape_cast %393 : vector<16x16xf32> to vector<2x8x16xf32>
    %c0_132 = arith.constant 0 : index
    %c0_133 = arith.constant 0 : index
    %c0_134 = arith.constant 0 : index
    %395 = vector.load %arg15[%c0_132, %c0_133, %c0_134] : memref<2x8x16xf32, #tpu.memory_space<vmem>>, vector<2x8x16xf32>
    tpu.vector_store %arg15[%c0_132, %c0_133, %c0_134], %394 {strides = array<i32>} : memref<2x8x16xf32, #tpu.memory_space<vmem>>, vector<2x8x16xf32>,
    return
  }
  func.func @transform_0(%arg0: i32) -> (i32, i32, i32) {
    %c0_i32 = arith.constant 0 : i32
    %c0_i32_0 = arith.constant 0 : i32
    %c0_i32_1 = arith.constant 0 : i32
    return %arg0, %c0_i32, %c0_i32_0 : i32, i32, i32
  }
  func.func @transform_1(%arg0: i32) -> (i32, i32) {
    %c0_i32 = arith.constant 0 : i32
    %c0_i32_0 = arith.constant 0 : i32
    %c0_i32_1 = arith.constant 0 : i32
    return %c0_i32, %c0_i32_0 : i32, i32
  }
  func.func @transform_2(%arg0: i32) -> (i32, i32) {
    %c0_i32 = arith.constant 0 : i32
    %c0_i32_0 = arith.constant 0 : i32
    %c0_i32_1 = arith.constant 0 : i32
    return %c0_i32, %c0_i32_0 : i32, i32
  }
  func.func @transform_3(%arg0: i32) -> (i32, i32) {
    %c0_i32 = arith.constant 0 : i32
    %c0_i32_0 = arith.constant 0 : i32
    %c0_i32_1 = arith.constant 0 : i32
    return %c0_i32, %c0_i32_0 : i32, i32
  }
  func.func @transform_4(%arg0: i32) -> (i32, i32) {
    %c0_i32 = arith.constant 0 : i32
    %c0_i32_0 = arith.constant 0 : i32
    %c0_i32_1 = arith.constant 0 : i32
    return %c0_i32, %c0_i32_0 : i32, i32
  }
  func.func @transform_5(%arg0: i32) -> (i32, i32) {
    %c0_i32 = arith.constant 0 : i32
    %c0_i32_0 = arith.constant 0 : i32
    %c0_i32_1 = arith.constant 0 : i32
    return %c0_i32, %c0_i32_0 : i32, i32
  }
  func.func @transform_6(%arg0: i32) -> (i32, i32) {
    %c0_i32 = arith.constant 0 : i32
    %c0_i32_0 = arith.constant 0 : i32
    %c0_i32_1 = arith.constant 0 : i32
    return %c0_i32, %c0_i32_0 : i32, i32
  }
  func.func @transform_7(%arg0: i32) -> (i32, i32) {
    %c0_i32 = arith.constant 0 : i32
    %c0_i32_0 = arith.constant 0 : i32
    %c0_i32_1 = arith.constant 0 : i32
    return %c0_i32, %c0_i32_0 : i32, i32
  }
  func.func @transform_8(%arg0: i32) -> (i32, i32) {
    %c0_i32 = arith.constant 0 : i32
    %c0_i32_0 = arith.constant 0 : i32
    %c0_i32_1 = arith.constant 0 : i32
    return %c0_i32, %c0_i32_0 : i32, i32
  }
  func.func @transform_9(%arg0: i32) -> (i32, i32) {
    %c0_i32 = arith.constant 0 : i32
    %c0_i32_0 = arith.constant 0 : i32
    %c0_i32_1 = arith.constant 0 : i32
    return %c0_i32, %c0_i32_0 : i32, i32
  }
  func.func @transform_10(%arg0: i32) -> (i32, i32) {
    %c0_i32 = arith.constant 0 : i32
    %c0_i32_0 = arith.constant 0 : i32
    %c0_i32_1 = arith.constant 0 : i32
    return %c0_i32, %c0_i32_0 : i32, i32
  }
  func.func @transform_11(%arg0: i32) -> (i32, i32) {
    %c0_i32 = arith.constant 0 : i32
    %c0_i32_0 = arith.constant 0 : i32
    %c0_i32_1 = arith.constant 0 : i32
    return %c0_i32, %c0_i32_0 : i32, i32
  }
  func.func @transform_12(%arg0: i32) -> (i32, i32) {
    %c0_i32 = arith.constant 0 : i32
    %c0_i32_0 = arith.constant 0 : i32
    %c0_i32_1 = arith.constant 0 : i32
    return %c0_i32, %c0_i32_0 : i32, i32
  }
  func.func @transform_13(%arg0: i32) -> (i32, i32) {
    %c0_i32 = arith.constant 0 : i32
    %c0_i32_0 = arith.constant 0 : i32
    %c0_i32_1 = arith.constant 0 : i32
    return %c0_i32, %c0_i32_0 : i32, i32
  }
  func.func @transform_14(%arg0: i32) -> (i32, i32, i32) {
    %c0_i32 = arith.constant 0 : i32
    %c0_i32_0 = arith.constant 0 : i32
    %c0_i32_1 = arith.constant 0 : i32
    return %arg0, %c0_i32, %c0_i32_0 : i32, i32, i32
  }
}

</mosaic_0001>

<llo_original>
// kernel: tpu_custom_call.1
$region0: #{tpu_custom_call.1}
  #allocation0 [shape = 'u32[]', space=smem, size = 0x4, offset = 0x4, fixed_abs, tag = 'smem constant byte address 0x4 - core index']
  #allocation1 [shape = 'u32[72,128]{1,0:T(1,128)}', space=vmem, size = 0x9000, scoped, tag = 'internal scratch']
  %s0 = inlined_call_operand.vmem [shape: bf16[2,8,16], index: 0, kind: input, shape index: {}]
  %s1 = inlined_call_operand.vmem [shape: s8[8,8], index: 1, kind: input, shape index: {}]
  %s2 = inlined_call_operand.vmem [shape: bf16[16,128], index: 2, kind: input, shape index: {}]
  %s3 = inlined_call_operand.vmem [shape: bf16[128,4], index: 3, kind: input, shape index: {}]
  %s4 = inlined_call_operand.vmem [shape: bf16[4,128], index: 4, kind: input, shape index: {}]
  %s5 = inlined_call_operand.vmem [shape: bf16[128,16], index: 5, kind: input, shape index: {}]
  %s6 = inlined_call_operand.vmem [shape: bf16[16,1], index: 6, kind: input, shape index: {}]
  %s7 = inlined_call_operand.vmem [shape: bf16[1,16], index: 7, kind: input, shape index: {}]
  %s8 = inlined_call_operand.vmem [shape: bf16[16,32], index: 8, kind: input, shape index: {}]
  %s9 = inlined_call_operand.vmem [shape: f32[1,32], index: 9, kind: input, shape index: {}]
  %s10 = inlined_call_operand.vmem [shape: bf16[32,16], index: 10, kind: input, shape index: {}]
  %s11 = inlined_call_operand.vmem [shape: f32[1,16], index: 11, kind: input, shape index: {}]
  %s12 = inlined_call_operand.vmem [shape: f32[1,16], index: 12, kind: input, shape index: {}]
  %s13 = inlined_call_operand.vmem [shape: f32[1,16], index: 13, kind: input, shape index: {}]
  %s14 = inlined_call_operand.hbm [shape: f32[2,8,16], index: 14, kind: output, shape index: {}]
  %s15 = sld [smem:[#allocation0]]
  $region66: #{tpu_custom_call.1} parent=0
    _
  %s17 = ssub.s32 1, %s15
  %s18 = scalar_select 0, %s17, %s15
  $region1: #{tpu_custom_call.1} parent=0
    #allocation2 [shape = 'u8[8192]{0}', space=vmem, size = 0x2000, scoped, tag = 'output window, operand 0, single buffered']
    #allocation3 [shape = 's32[1]{0}', space=sflag, size = 0x4, scoped, tag = 'scoped memory for tpu_custom_call.1']
    %19 = vsyncpa [#allocation3], 0
    // Predicated region
    $region2: #{tpu_custom_call.1} parent=1 // pred_check
      _
    $region3: #{tpu_custom_call.1} parent=1 // pred_check_branch
      %21 = sbr.rel (0) target = $region5
    $region4: #{tpu_custom_call.1} parent=1 // pred_region
      _
    $region5: #{tpu_custom_call.1} parent=1 // pred_fallthru
      _
    // Predicated region
    $region6: #{tpu_custom_call.1} parent=1 // pred_check
      _
    $region7: #{tpu_custom_call.1} parent=1 // pred_check_branch
      %23 = sbr.rel (0) target = $region9
    $region8: #{tpu_custom_call.1} parent=1 // pred_region
      _
    $region9: #{tpu_custom_call.1} parent=1 // pred_fallthru
      _
    // Predicated region
    $region10: #{tpu_custom_call.1} parent=1 // pred_check
      _
    $region11: #{tpu_custom_call.1} parent=1 // pred_check_branch
      %25 = sbr.rel (0) target = $region13
    $region12: #{tpu_custom_call.1} parent=1 // pred_region
      _
    $region13: #{tpu_custom_call.1} parent=1 // pred_fallthru
      _
    // Predicated region
    $region14: #{tpu_custom_call.1} parent=1 // pred_check
      _
    $region15: #{tpu_custom_call.1} parent=1 // pred_check_branch
      %27 = sbr.rel (0) target = $region17
    $region16: #{tpu_custom_call.1} parent=1 // pred_region
      _
    $region17: #{tpu_custom_call.1} parent=1 // pred_fallthru
      _
    // Predicated region
    $region18: #{tpu_custom_call.1} parent=1 // pred_check
      _
    $region19: #{tpu_custom_call.1} parent=1 // pred_check_branch
      %29 = sbr.rel (0) target = $region21
    $region20: #{tpu_custom_call.1} parent=1 // pred_region
      _
    $region21: #{tpu_custom_call.1} parent=1 // pred_fallthru
      _
    // Predicated region
    $region22: #{tpu_custom_call.1} parent=1 // pred_check
      _
    $region23: #{tpu_custom_call.1} parent=1 // pred_check_branch
      %31 = sbr.rel (0) target = $region25
    $region24: #{tpu_custom_call.1} parent=1 // pred_region
      _
    $region25: #{tpu_custom_call.1} parent=1 // pred_fallthru
      _
    // Predicated region
    $region26: #{tpu_custom_call.1} parent=1 // pred_check
      _
    $region27: #{tpu_custom_call.1} parent=1 // pred_check_branch
      %33 = sbr.rel (0) target = $region29
    $region28: #{tpu_custom_call.1} parent=1 // pred_region
      _
    $region29: #{tpu_custom_call.1} parent=1 // pred_fallthru
      _
    // Predicated region
    $region30: #{tpu_custom_call.1} parent=1 // pred_check
      _
    $region31: #{tpu_custom_call.1} parent=1 // pred_check_branch
      %35 = sbr.rel (0) target = $region33
    $region32: #{tpu_custom_call.1} parent=1 // pred_region
      _
    $region33: #{tpu_custom_call.1} parent=1 // pred_fallthru
      _
    // Predicated region
    $region34: #{tpu_custom_call.1} parent=1 // pred_check
      _
    $region35: #{tpu_custom_call.1} parent=1 // pred_check_branch
      %37 = sbr.rel (0) target = $region37
    $region36: #{tpu_custom_call.1} parent=1 // pred_region
      _
    $region37: #{tpu_custom_call.1} parent=1 // pred_fallthru
      _
    // Predicated region
    $region38: #{tpu_custom_call.1} parent=1 // pred_check
      _
    $region39: #{tpu_custom_call.1} parent=1 // pred_check_branch
      %39 = sbr.rel (0) target = $region41
    $region40: #{tpu_custom_call.1} parent=1 // pred_region
      _
    $region41: #{tpu_custom_call.1} parent=1 // pred_fallthru
      _
    // Predicated region
    $region42: #{tpu_custom_call.1} parent=1 // pred_check
      _
    $region43: #{tpu_custom_call.1} parent=1 // pred_check_branch
      %41 = sbr.rel (0) target = $region45
    $region44: #{tpu_custom_call.1} parent=1 // pred_region
      _
    $region45: #{tpu_custom_call.1} parent=1 // pred_fallthru
      _
    // Predicated region
    $region46: #{tpu_custom_call.1} parent=1 // pred_check
      _
    $region47: #{tpu_custom_call.1} parent=1 // pred_check_branch
      %43 = sbr.rel (0) target = $region49
    $region48: #{tpu_custom_call.1} parent=1 // pred_region
      _
    $region49: #{tpu_custom_call.1} parent=1 // pred_fallthru
      _
    // Predicated region
    $region50: #{tpu_custom_call.1} parent=1 // pred_check
      _
    $region51: #{tpu_custom_call.1} parent=1 // pred_check_branch
      %45 = sbr.rel (0) target = $region53
    $region52: #{tpu_custom_call.1} parent=1 // pred_region
      _
    $region53: #{tpu_custom_call.1} parent=1 // pred_fallthru
      _
    // Predicated region
    $region54: #{tpu_custom_call.1} parent=1 // pred_check
      _
    $region55: #{tpu_custom_call.1} parent=1 // pred_check_branch
      %47 = sbr.rel (0) target = $region57
    $region56: #{tpu_custom_call.1} parent=1 // pred_region
      _
    $region57: #{tpu_custom_call.1} parent=1 // pred_fallthru
      _
    %v49 = vld [vmem:[%s0] sm:$0xf]
    %v50 = vld [vmem:[%s0 + $0x4] sm:$0xf]
    %v51 = vld [vmem:[%s1] sm:$0x3]
    %v52 = vunpack.c.0.s8 %v51
    %v53 = vcvt.s32.f32 %v52
    %vm54 = vcmp.gt.f32.partialorder %v53, 0.0
    %v55 = vld [vmem:[%s2] sm:$0xf]
    %v56 = vld [vmem:[%s2 + $0x4] sm:$0xf]
    %v59 = vunpack.c.l.b16 %v49
    %v60 = vunpack.c.l.b16 %v50
    %v61 = vpack.c.b16 %v60, %v59
    %v64 = vunpack.c.l.b16 %v55
    %v65 = vunpack.c.l.b16 %v56
    %v66 = vpack.c.b16 %v65, %v64
    %vm68 = vcmask 130048
    %v70 = vsel %vm68, %v61, 0
    %72 = vmatpush.bf16.msra.mxu0 0
    %73 = vmatpush.bf16.msra.mxu0 0
    %74 = vmatpush.bf16.msra.mxu0 0
    %75 = vmatpush.bf16.msra.mxu0 0
    %76 = vmatpush.bf16.msra.mxu0 0
    %77 = vmatpush.bf16.msra.mxu0 0
    %78 = vmatpush.bf16.msra.mxu0 0
    %79 = vmatpush.bf16.msra.mxu0 %v66
    %80 = vmatmul.bf16.gmra.mxu0 %v70
    %v81 = vpop.f32.mrf.mxu0
    %v82 = vadd.f32 0.0, %v81
    %v83 = vpop.f32.mrf.mxu0
    %v84 = vadd.f32 0.0, %v83
    %85 = vdwg.mxu0
    %v86 = vpack.c.bf16 %v82, %v82
    %v87 = vpack.c.bf16 %v84, %v84
    %v88 = vld [vmem:[%s3] sm:$0xf]
    %v89 = vld [vmem:[%s3 + $0x4] sm:$0xf]
    %v90 = vld [vmem:[%s3 + $0x8] sm:$0xf]
    %v91 = vld [vmem:[%s3 + $0xc] sm:$0xf]
    %v92 = vld [vmem:[%s3 + $0x10] sm:$0xf]
    %v93 = vld [vmem:[%s3 + $0x14] sm:$0xf]
    %v94 = vld [vmem:[%s3 + $0x18] sm:$0xf]
    %v95 = vld [vmem:[%s3 + $0x1c] sm:$0xf]
    %v96 = vld [vmem:[%s3 + $0x20] sm:$0xf]
    %v97 = vld [vmem:[%s3 + $0x24] sm:$0xf]
    %v98 = vld [vmem:[%s3 + $0x28] sm:$0xf]
    %v99 = vld [vmem:[%s3 + $0x2c] sm:$0xf]
    %v100 = vld [vmem:[%s3 + $0x30] sm:$0xf]
    %v101 = vld [vmem:[%s3 + $0x34] sm:$0xf]
    %v102 = vld [vmem:[%s3 + $0x38] sm:$0xf]
    %v103 = vld [vmem:[%s3 + $0x3c] sm:$0xf]
    %v106 = vunpack.c.l.b16 %v86
    %v107 = vunpack.c.l.b16 %v87
    %v108 = vpack.c.b16 %v107, %v106
    %v126 = vunpack.c.l.b16 %v88
    %v127 = vunpack.c.l.b16 %v89
    %v128 = vunpack.c.l.b16 %v90
    %v129 = vunpack.c.l.b16 %v91
    %v130 = vunpack.c.l.b16 %v92
    %v131 = vunpack.c.l.b16 %v93
    %v132 = vunpack.c.l.b16 %v94
    %v133 = vunpack.c.l.b16 %v95
    %v134 = vunpack.c.l.b16 %v96
    %v135 = vunpack.c.l.b16 %v97
    %v136 = vunpack.c.l.b16 %v98
    %v137 = vunpack.c.l.b16 %v99
    %v138 = vunpack.c.l.b16 %v100
    %v139 = vunpack.c.l.b16 %v101
    %v140 = vunpack.c.l.b16 %v102
    %v141 = vunpack.c.l.b16 %v103
    %v142 = vpack.c.b16 %v127, %v126
    %v143 = vpack.c.b16 %v129, %v128
    %v144 = vpack.c.b16 %v131, %v130
    %v145 = vpack.c.b16 %v133, %v132
    %v146 = vpack.c.b16 %v135, %v134
    %v147 = vpack.c.b16 %v137, %v136
    %v148 = vpack.c.b16 %v139, %v138
    %v149 = vpack.c.b16 %v141, %v140
    %158 = vmatpush.bf16.msra.mxu0 %v149
    %159 = vmatpush.bf16.msra.mxu0 %v148
    %160 = vmatpush.bf16.msra.mxu0 %v147
    %161 = vmatpush.bf16.msra.mxu0 %v146
    %162 = vmatpush.bf16.msra.mxu0 %v145
    %163 = vmatpush.bf16.msra.mxu0 %v144
    %164 = vmatpush.bf16.msra.mxu0 %v143
    %165 = vmatpush.bf16.msra.mxu0 %v142
    %166 = vmatmul.bf16.gmra.mxu0 %v108
    %v167 = vpop.f32.mrf.mxu0
    %v168 = vadd.f32 0.0, %v167
    %v169 = vpop.f32.mrf.mxu0
    %v170 = vadd.f32 0.0, %v169
    %171 = vdwg.mxu0
    %v172 = vld [vmem:[%s4] sm:$0x3]
    %173 = vmatpush.bf16.xpose.msra.mxu0 0
    %174 = vmatpush.bf16.xpose.msra.mxu0 0
    %175 = vmatpush.bf16.xpose.msra.mxu0 0
    %176 = vmatpush.bf16.xpose.msra.mxu0 0
    %177 = vmatpush.bf16.xpose.msra.mxu0 0
    %178 = vmatpush.bf16.xpose.msra.mxu0 0
    %179 = vmatpush.bf16.xpose.msra.mxu0 0
    %180 = vmatpush.bf16.xpose.msra.mxu0 %v108
    %181 = vmatmul.bf16.gmra.mxu0 %v172
    %v182 = vpop.f32.mrf.mxu0
    %v183 = vadd.f32 0.0, %v182
    %v184 = vpop.f32.mrf.mxu0
    %185 = vdwg.mxu0
    %187 = vset.pattern.permute.xlu0 0
    %188 = vperm.xlu0 %187, %v168
    %v189 = vpop.permute.xlu0 %188
    %v191 = vperm.slane %v183, 0
    %v192 = vadd.f32 %v189, %v191
    %vm193 = vcmp.gt.f32.partialorder %v192, 0.0
    %v194 = vmul.f32 %v192, 0.01
    %v195 = vsel %vm193, %v192, %v194
    %v196 = vsel %vm54, %v195, -9e+15
    %vm197 = vcmask 64512
    %v198 = vsel %vm197, %v196, -inf
    %199 = vmax.xlane.f32.xlu0 %v198
    %v200 = vpop.xlane.xlu0 %199
    %v201 = vsub.f32 %v196, %v200
    %v202 = vmul.f32 %v201, 1.442695
    %v203 = vpow.pop %v202
    %v204 = vsel %vm197, %v203, 0.0
    %205 = vadd.xlane.f32.xlu0 %v204
    %v206 = vpop.xlane.xlu0 %205
    %v207 = vrcp.pop %v206
    %v208 = vmul.f32 %v203, %v207
    %v209 = vpack.c.bf16 %v208, %v208
    %v211 = vsel %vm197, %v209, 0
    %vm213 = vcmask 1043456
    %v215 = vsel %vm213, %v86, 0
    %217 = vmatpush.bf16.msra.mxu0 0
    %218 = vmatpush.bf16.msra.mxu0 0
    %219 = vmatpush.bf16.msra.mxu0 0
    %220 = vmatpush.bf16.msra.mxu0 0
    %221 = vmatpush.bf16.msra.mxu0 0
    %222 = vmatpush.bf16.msra.mxu0 0
    %223 = vmatpush.bf16.msra.mxu0 0
    %224 = vmatpush.bf16.msra.mxu0 %v215
    %225 = vmatmul.bf16.gmra.mxu0 %v211
    %v226 = vpop.f32.mrf.mxu0
    %v227 = vadd.f32 0.0, %v226
    %v228 = vpop.f32.mrf.mxu0
    %229 = vdwg.mxu0
    %vm230 = vcmp.gt.f32.partialorder %v227, 0.0
    %v231 = vmin.f32 %v227, 0.0
    %v232 = vmul.f32 %v231, 1.442695
    %v233 = vpow.pop %v232
    %v234 = vsub.f32 %v233, 1.0
    %v235 = vsel %vm230, %v227, %v234
    %236 = vset.pattern.permute.xlu0 1
    %237 = vperm.xlu0 %236, %v168
    %v238 = vpop.permute.xlu0 %237
    %v240 = vperm.slane %v183, 1
    %v241 = vadd.f32 %v238, %v240
    %vm242 = vcmp.gt.f32.partialorder %v241, 0.0
    %v243 = vmul.f32 %v241, 0.01
    %v244 = vsel %vm242, %v241, %v243
    %v245 = vsel %vm54, %v244, -9e+15
    %v246 = vsel %vm197, %v245, -inf
    %247 = vmax.xlane.f32.xlu0 %v246
    %v248 = vpop.xlane.xlu0 %247
    %v249 = vsub.f32 %v245, %v248
    %v250 = vmul.f32 %v249, 1.442695
    %v251 = vpow.pop %v250
    %v252 = vsel %vm197, %v251, 0.0
    %253 = vadd.xlane.f32.xlu0 %v252
    %v254 = vpop.xlane.xlu0 %253
    %v255 = vrcp.pop %v254
    %v256 = vmul.f32 %v251, %v255
    %v257 = vpack.c.bf16 %v256, %v256
    %v258 = vpack.c.b16 %v106, %v106
    %259 = vrot.lane.b32.xlu0 %v258, 96
    %v260 = vpop.permute.xlu0 %259
    %v262 = vsel %vm197, %v257, 0
    %v265 = vsel %vm213, %v260, 0
    %267 = vmatpush.bf16.msra.mxu0 0
    %268 = vmatpush.bf16.msra.mxu0 0
    %269 = vmatpush.bf16.msra.mxu0 0
    %270 = vmatpush.bf16.msra.mxu0 0
    %271 = vmatpush.bf16.msra.mxu0 0
    %272 = vmatpush.bf16.msra.mxu0 0
    %273 = vmatpush.bf16.msra.mxu0 0
    %274 = vmatpush.bf16.msra.mxu0 %v265
    %275 = vmatmul.bf16.gmra.mxu0 %v262
    %v276 = vpop.f32.mrf.mxu0
    %v277 = vadd.f32 0.0, %v276
    %v278 = vpop.f32.mrf.mxu0
    %279 = vdwg.mxu0
    %vm280 = vcmp.gt.f32.partialorder %v277, 0.0
    %v281 = vmin.f32 %v277, 0.0
    %v282 = vmul.f32 %v281, 1.442695
    %v283 = vpow.pop %v282
    %v284 = vsub.f32 %v283, 1.0
    %v285 = vsel %vm280, %v277, %v284
    %286 = vset.pattern.permute.xlu0 2
    %287 = vperm.xlu0 %286, %v168
    %v288 = vpop.permute.xlu0 %287
    %v290 = vperm.slane %v183, 2
    %v291 = vadd.f32 %v288, %v290
    %vm292 = vcmp.gt.f32.partialorder %v291, 0.0
    %v293 = vmul.f32 %v291, 0.01
    %v294 = vsel %vm292, %v291, %v293
    %v295 = vsel %vm54, %v294, -9e+15
    %v296 = vsel %vm197, %v295, -inf
    %297 = vmax.xlane.f32.xlu0 %v296
    %v298 = vpop.xlane.xlu0 %297
    %v299 = vsub.f32 %v295, %v298
    %v300 = vmul.f32 %v299, 1.442695
    %v301 = vpow.pop %v300
    %v302 = vsel %vm197, %v301, 0.0
    %303 = vadd.xlane.f32.xlu0 %v302
    %v304 = vpop.xlane.xlu0 %303
    %v305 = vrcp.pop %v304
    %v306 = vmul.f32 %v301, %v305
    %v307 = vpack.c.bf16 %v306, %v306
    %308 = vrot.lane.b32.xlu0 %v258, 64
    %v309 = vpop.permute.xlu0 %308
    %v311 = vsel %vm197, %v307, 0
    %v314 = vsel %vm213, %v309, 0
    %316 = vmatpush.bf16.msra.mxu0 0
    %317 = vmatpush.bf16.msra.mxu0 0
    %318 = vmatpush.bf16.msra.mxu0 0
    %319 = vmatpush.bf16.msra.mxu0 0
    %320 = vmatpush.bf16.msra.mxu0 0
    %321 = vmatpush.bf16.msra.mxu0 0
    %322 = vmatpush.bf16.msra.mxu0 0
    %323 = vmatpush.bf16.msra.mxu0 %v314
    %324 = vmatmul.bf16.gmra.mxu0 %v311
    %v325 = vpop.f32.mrf.mxu0
    %v326 = vadd.f32 0.0, %v325
    %v327 = vpop.f32.mrf.mxu0
    %328 = vdwg.mxu0
    %vm329 = vcmp.gt.f32.partialorder %v326, 0.0
    %v330 = vmin.f32 %v326, 0.0
    %v331 = vmul.f32 %v330, 1.442695
    %v332 = vpow.pop %v331
    %v333 = vsub.f32 %v332, 1.0
    %v334 = vsel %vm329, %v326, %v333
    %335 = vset.pattern.permute.xlu0 3
    %336 = vperm.xlu0 %335, %v168
    %v337 = vpop.permute.xlu0 %336
    %v339 = vperm.slane %v183, 3
    %v340 = vadd.f32 %v337, %v339
    %vm341 = vcmp.gt.f32.partialorder %v340, 0.0
    %v342 = vmul.f32 %v340, 0.01
    %v343 = vsel %vm341, %v340, %v342
    %v344 = vsel %vm54, %v343, -9e+15
    %v345 = vsel %vm197, %v344, -inf
    %346 = vmax.xlane.f32.xlu0 %v345
    %v347 = vpop.xlane.xlu0 %346
    %v348 = vsub.f32 %v344, %v347
    %v349 = vmul.f32 %v348, 1.442695
    %v350 = vpow.pop %v349
    %v351 = vsel %vm197, %v350, 0.0
    %352 = vadd.xlane.f32.xlu0 %v351
    %v353 = vpop.xlane.xlu0 %352
    %v354 = vrcp.pop %v353
    %v355 = vmul.f32 %v350, %v354
    %v356 = vpack.c.bf16 %v355, %v355
    %357 = vrot.lane.b32.xlu0 %v258, 32
    %v358 = vpop.permute.xlu0 %357
    %v360 = vsel %vm197, %v356, 0
    %v363 = vsel %vm213, %v358, 0
    %365 = vmatpush.bf16.msra.mxu0 0
    %366 = vmatpush.bf16.msra.mxu0 0
    %367 = vmatpush.bf16.msra.mxu0 0
    %368 = vmatpush.bf16.msra.mxu0 0
    %369 = vmatpush.bf16.msra.mxu0 0
    %370 = vmatpush.bf16.msra.mxu0 0
    %371 = vmatpush.bf16.msra.mxu0 0
    %372 = vmatpush.bf16.msra.mxu0 %v363
    %373 = vmatmul.bf16.gmra.mxu0 %v360
    %v374 = vpop.f32.mrf.mxu0
    %v375 = vadd.f32 0.0, %v374
    %v376 = vpop.f32.mrf.mxu0
    %377 = vdwg.mxu0
    %vm378 = vcmp.gt.f32.partialorder %v375, 0.0
    %v379 = vmin.f32 %v375, 0.0
    %v380 = vmul.f32 %v379, 1.442695
    %v381 = vpow.pop %v380
    %v382 = vsub.f32 %v381, 1.0
    %v383 = vsel %vm378, %v375, %v382
    %385 = vrot.lane.b32.xlu0 %v285, 32
    %v386 = vpop.permute.xlu0 %385
    %389 = vrot.lane.b32.xlu0 %v334, 64
    %v390 = vpop.permute.xlu0 %389
    %393 = vrot.lane.b32.xlu0 %v383, 96
    %v394 = vpop.permute.xlu0 %393
    %vm396 = vcmask 261120
    %v397 = vsel %vm396, %v235, %v386
    %vm398 = vcmask 523264
    %v399 = vsel %vm398, %v397, %v390
    %vm400 = vcmask 785408
    %v401 = vsel %vm400, %v399, %v394
    %403 = vset.pattern.permute.xlu0 0
    %404 = vperm.xlu0 %403, %v170
    %v405 = vpop.permute.xlu0 %404
    %v407 = vadd.f32 %v405, %v191
    %vm408 = vcmp.gt.f32.partialorder %v407, 0.0
    %v409 = vmul.f32 %v407, 0.01
    %v410 = vsel %vm408, %v407, %v409
    %412 = vrot.lane.b32.xlu0 %v410, 120
    %v413 = vpop.permute.xlu0 %412
    %v415 = vsel %vm54, %v413, -9e+15
    %v416 = vsel %vm197, %v415, -inf
    %417 = vmax.xlane.f32.xlu0 %v416
    %v418 = vpop.xlane.xlu0 %417
    %v419 = vsub.f32 %v415, %v418
    %v420 = vmul.f32 %v419, 1.442695
    %v421 = vpow.pop %v420
    %v422 = vsel %vm197, %v421, 0.0
    %423 = vadd.xlane.f32.xlu0 %v422
    %v424 = vpop.xlane.xlu0 %423
    %v425 = vrcp.pop %v424
    %v426 = vmul.f32 %v421, %v425
    %v427 = vpack.c.bf16 %v426, %v426
    %v429 = vsel %vm197, %v427, 0
    %v432 = vsel %vm213, %v87, 0
    %434 = vmatpush.bf16.msra.mxu0 0
    %435 = vmatpush.bf16.msra.mxu0 0
    %436 = vmatpush.bf16.msra.mxu0 0
    %437 = vmatpush.bf16.msra.mxu0 0
    %438 = vmatpush.bf16.msra.mxu0 0
    %439 = vmatpush.bf16.msra.mxu0 0
    %440 = vmatpush.bf16.msra.mxu0 0
    %441 = vmatpush.bf16.msra.mxu0 %v432
    %442 = vmatmul.bf16.gmra.mxu0 %v429
    %v443 = vpop.f32.mrf.mxu0
    %v444 = vadd.f32 0.0, %v443
    %v445 = vpop.f32.mrf.mxu0
    %446 = vdwg.mxu0
    %vm447 = vcmp.gt.f32.partialorder %v444, 0.0
    %v448 = vmin.f32 %v444, 0.0
    %v449 = vmul.f32 %v448, 1.442695
    %v450 = vpow.pop %v449
    %v451 = vsub.f32 %v450, 1.0
    %v452 = vsel %vm447, %v444, %v451
    %453 = vset.pattern.permute.xlu0 1
    %454 = vperm.xlu0 %453, %v170
    %v455 = vpop.permute.xlu0 %454
    %v457 = vadd.f32 %v455, %v240
    %vm458 = vcmp.gt.f32.partialorder %v457, 0.0
    %v459 = vmul.f32 %v457, 0.01
    %v460 = vsel %vm458, %v457, %v459
    %462 = vrot.lane.b32.xlu0 %v460, 120
    %v463 = vpop.permute.xlu0 %462
    %v465 = vsel %vm54, %v463, -9e+15
    %v466 = vsel %vm197, %v465, -inf
    %467 = vmax.xlane.f32.xlu0 %v466
    %v468 = vpop.xlane.xlu0 %467
    %v469 = vsub.f32 %v465, %v468
    %v470 = vmul.f32 %v469, 1.442695
    %v471 = vpow.pop %v470
    %v472 = vsel %vm197, %v471, 0.0
    %473 = vadd.xlane.f32.xlu0 %v472
    %v474 = vpop.xlane.xlu0 %473
    %v475 = vrcp.pop %v474
    %v476 = vmul.f32 %v471, %v475
    %v477 = vpack.c.bf16 %v476, %v476
    %v478 = vpack.c.b16 %v107, %v107
    %479 = vrot.lane.b32.xlu0 %v478, 96
    %v480 = vpop.permute.xlu0 %479
    %v482 = vsel %vm197, %v477, 0
    %v485 = vsel %vm213, %v480, 0
    %487 = vmatpush.bf16.msra.mxu0 0
    %488 = vmatpush.bf16.msra.mxu0 0
    %489 = vmatpush.bf16.msra.mxu0 0
    %490 = vmatpush.bf16.msra.mxu0 0
    %491 = vmatpush.bf16.msra.mxu0 0
    %492 = vmatpush.bf16.msra.mxu0 0
    %493 = vmatpush.bf16.msra.mxu0 0
    %494 = vmatpush.bf16.msra.mxu0 %v485
    %495 = vmatmul.bf16.gmra.mxu0 %v482
    %v496 = vpop.f32.mrf.mxu0
    %v497 = vadd.f32 0.0, %v496
    %v498 = vpop.f32.mrf.mxu0
    %499 = vdwg.mxu0
    %vm500 = vcmp.gt.f32.partialorder %v497, 0.0
    %v501 = vmin.f32 %v497, 0.0
    %v502 = vmul.f32 %v501, 1.442695
    %v503 = vpow.pop %v502
    %v504 = vsub.f32 %v503, 1.0
    %v505 = vsel %vm500, %v497, %v504
    %506 = vset.pattern.permute.xlu0 2
    %507 = vperm.xlu0 %506, %v170
    %v508 = vpop.permute.xlu0 %507
    %v510 = vadd.f32 %v508, %v290
    %vm511 = vcmp.gt.f32.partialorder %v510, 0.0
    %v512 = vmul.f32 %v510, 0.01
    %v513 = vsel %vm511, %v510, %v512
    %515 = vrot.lane.b32.xlu0 %v513, 120
    %v516 = vpop.permute.xlu0 %515
    %v518 = vsel %vm54, %v516, -9e+15
    %v519 = vsel %vm197, %v518, -inf
    %520 = vmax.xlane.f32.xlu0 %v519
    %v521 = vpop.xlane.xlu0 %520
    %v522 = vsub.f32 %v518, %v521
    %v523 = vmul.f32 %v522, 1.442695
    %v524 = vpow.pop %v523
    %v525 = vsel %vm197, %v524, 0.0
    %526 = vadd.xlane.f32.xlu0 %v525
    %v527 = vpop.xlane.xlu0 %526
    %v528 = vrcp.pop %v527
    %v529 = vmul.f32 %v524, %v528
    %v530 = vpack.c.bf16 %v529, %v529
    %531 = vrot.lane.b32.xlu0 %v478, 64
    %v532 = vpop.permute.xlu0 %531
    %v534 = vsel %vm197, %v530, 0
    %v537 = vsel %vm213, %v532, 0
    %539 = vmatpush.bf16.msra.mxu0 0
    %540 = vmatpush.bf16.msra.mxu0 0
    %541 = vmatpush.bf16.msra.mxu0 0
    %542 = vmatpush.bf16.msra.mxu0 0
    %543 = vmatpush.bf16.msra.mxu0 0
    %544 = vmatpush.bf16.msra.mxu0 0
    %545 = vmatpush.bf16.msra.mxu0 0
    %546 = vmatpush.bf16.msra.mxu0 %v537
    %547 = vmatmul.bf16.gmra.mxu0 %v534
    %v548 = vpop.f32.mrf.mxu0
    %v549 = vadd.f32 0.0, %v548
    %v550 = vpop.f32.mrf.mxu0
    %551 = vdwg.mxu0
    %vm552 = vcmp.gt.f32.partialorder %v549, 0.0
    %v553 = vmin.f32 %v549, 0.0
    %v554 = vmul.f32 %v553, 1.442695
    %v555 = vpow.pop %v554
    %v556 = vsub.f32 %v555, 1.0
    %v557 = vsel %vm552, %v549, %v556
    %558 = vset.pattern.permute.xlu0 3
    %559 = vperm.xlu0 %558, %v170
    %v560 = vpop.permute.xlu0 %559
    %v562 = vadd.f32 %v560, %v339
    %vm563 = vcmp.gt.f32.partialorder %v562, 0.0
    %v564 = vmul.f32 %v562, 0.01
    %v565 = vsel %vm563, %v562, %v564
    %567 = vrot.lane.b32.xlu0 %v565, 120
    %v568 = vpop.permute.xlu0 %567
    %v570 = vsel %vm54, %v568, -9e+15
    %v571 = vsel %vm197, %v570, -inf
    %572 = vmax.xlane.f32.xlu0 %v571
    %v573 = vpop.xlane.xlu0 %572
    %v574 = vsub.f32 %v570, %v573
    %v575 = vmul.f32 %v574, 1.442695
    %v576 = vpow.pop %v575
    %v577 = vsel %vm197, %v576, 0.0
    %578 = vadd.xlane.f32.xlu0 %v577
    %v579 = vpop.xlane.xlu0 %578
    %v580 = vrcp.pop %v579
    %v581 = vmul.f32 %v576, %v580
    %v582 = vpack.c.bf16 %v581, %v581
    %583 = vrot.lane.b32.xlu0 %v478, 32
    %v584 = vpop.permute.xlu0 %583
    %v586 = vsel %vm197, %v582, 0
    %v589 = vsel %vm213, %v584, 0
    %591 = vmatpush.bf16.msra.mxu0 0
    %592 = vmatpush.bf16.msra.mxu0 0
    %593 = vmatpush.bf16.msra.mxu0 0
    %594 = vmatpush.bf16.msra.mxu0 0
    %595 = vmatpush.bf16.msra.mxu0 0
    %596 = vmatpush.bf16.msra.mxu0 0
    %597 = vmatpush.bf16.msra.mxu0 0
    %598 = vmatpush.bf16.msra.mxu0 %v589
    %599 = vmatmul.bf16.gmra.mxu0 %v586
    %v600 = vpop.f32.mrf.mxu0
    %v601 = vadd.f32 0.0, %v600
    %v602 = vpop.f32.mrf.mxu0
    %603 = vdwg.mxu0
    %vm604 = vcmp.gt.f32.partialorder %v601, 0.0
    %v605 = vmin.f32 %v601, 0.0
    %v606 = vmul.f32 %v605, 1.442695
    %v607 = vpow.pop %v606
    %v608 = vsub.f32 %v607, 1.0
    %v609 = vsel %vm604, %v601, %v608
    %611 = vrot.lane.b32.xlu0 %v505, 32
    %v612 = vpop.permute.xlu0 %611
    %615 = vrot.lane.b32.xlu0 %v557, 64
    %v616 = vpop.permute.xlu0 %615
    %619 = vrot.lane.b32.xlu0 %v609, 96
    %v620 = vpop.permute.xlu0 %619
    %v622 = vsel %vm396, %v452, %v612
    %v623 = vsel %vm398, %v622, %v616
    %v624 = vsel %vm400, %v623, %v620
    %v625 = vpack.c.bf16 %v624, %v401
    %v626 = vld [vmem:[%s5] sm:$0xf]
    %v627 = vld [vmem:[%s5 + $0x4] sm:$0xf]
    %v628 = vld [vmem:[%s5 + $0x8] sm:$0xf]
    %v629 = vld [vmem:[%s5 + $0xc] sm:$0xf]
    %v630 = vld [vmem:[%s5 + $0x10] sm:$0xf]
    %v631 = vld [vmem:[%s5 + $0x14] sm:$0xf]
    %v632 = vld [vmem:[%s5 + $0x18] sm:$0xf]
    %v633 = vld [vmem:[%s5 + $0x1c] sm:$0xf]
    %v634 = vld [vmem:[%s5 + $0x20] sm:$0xf]
    %v635 = vld [vmem:[%s5 + $0x24] sm:$0xf]
    %v636 = vld [vmem:[%s5 + $0x28] sm:$0xf]
    %v637 = vld [vmem:[%s5 + $0x2c] sm:$0xf]
    %v638 = vld [vmem:[%s5 + $0x30] sm:$0xf]
    %v639 = vld [vmem:[%s5 + $0x34] sm:$0xf]
    %v640 = vld [vmem:[%s5 + $0x38] sm:$0xf]
    %v641 = vld [vmem:[%s5 + $0x3c] sm:$0xf]
    %v658 = vunpack.c.l.b16 %v626
    %v659 = vunpack.c.l.b16 %v627
    %v660 = vunpack.c.l.b16 %v628
    %v661 = vunpack.c.l.b16 %v629
    %v662 = vunpack.c.l.b16 %v630
    %v663 = vunpack.c.l.b16 %v631
    %v664 = vunpack.c.l.b16 %v632
    %v665 = vunpack.c.l.b16 %v633
    %v666 = vunpack.c.l.b16 %v634
    %v667 = vunpack.c.l.b16 %v635
    %v668 = vunpack.c.l.b16 %v636
    %v669 = vunpack.c.l.b16 %v637
    %v670 = vunpack.c.l.b16 %v638
    %v671 = vunpack.c.l.b16 %v639
    %v672 = vunpack.c.l.b16 %v640
    %v673 = vunpack.c.l.b16 %v641
    %v674 = vpack.c.b16 %v659, %v658
    %v675 = vpack.c.b16 %v661, %v660
    %v676 = vpack.c.b16 %v663, %v662
    %v677 = vpack.c.b16 %v665, %v664
    %v678 = vpack.c.b16 %v667, %v666
    %v679 = vpack.c.b16 %v669, %v668
    %v680 = vpack.c.b16 %v671, %v670
    %v681 = vpack.c.b16 %v673, %v672
    %690 = vmatpush.bf16.msra.mxu0 %v681
    %691 = vmatpush.bf16.msra.mxu0 %v680
    %692 = vmatpush.bf16.msra.mxu0 %v679
    %693 = vmatpush.bf16.msra.mxu0 %v678
    %694 = vmatpush.bf16.msra.mxu0 %v677
    %695 = vmatpush.bf16.msra.mxu0 %v676
    %696 = vmatpush.bf16.msra.mxu0 %v675
    %697 = vmatpush.bf16.msra.mxu0 %v674
    %698 = vmatmul.bf16.gmra.mxu0 %v625
    %v699 = vpop.f32.mrf.mxu0
    %v700 = vadd.f32 0.0, %v699
    %v701 = vpop.f32.mrf.mxu0
    %v702 = vadd.f32 0.0, %v701
    %703 = vdwg.mxu0
    %v704 = vpack.c.bf16 %v700, %v700
    %v705 = vpack.c.bf16 %v702, %v702
    %v706 = vld [vmem:[%s6] sm:$0xf]
    %v707 = vld [vmem:[%s6 + $0x4] sm:$0xf]
    %v710 = vunpack.c.l.b16 %v704
    %v711 = vunpack.c.l.b16 %v705
    %v712 = vpack.c.b16 %v711, %v710
    %v715 = vunpack.c.l.b16 %v706
    %v716 = vunpack.c.l.b16 %v707
    %v717 = vpack.c.b16 %v716, %v715
    %v720 = vsel %vm68, %v712, 0
    %722 = vmatpush.bf16.msra.mxu0 0
    %723 = vmatpush.bf16.msra.mxu0 0
    %724 = vmatpush.bf16.msra.mxu0 0
    %725 = vmatpush.bf16.msra.mxu0 0
    %726 = vmatpush.bf16.msra.mxu0 0
    %727 = vmatpush.bf16.msra.mxu0 0
    %728 = vmatpush.bf16.msra.mxu0 0
    %729 = vmatpush.bf16.msra.mxu0 %v717
    %730 = vmatmul.bf16.gmra.mxu0 %v720
    %v731 = vpop.f32.mrf.mxu0
    %v732 = vadd.f32 0.0, %v731
    %v733 = vpop.f32.mrf.mxu0
    %v734 = vadd.f32 0.0, %v733
    %735 = vdwg.mxu0
    %v736 = vld [vmem:[%s7] sm:$0x1]
    %v738 = vsel %vm68, %v736, 0
    %740 = vmatpush.bf16.xpose.msra.mxu0 0
    %741 = vmatpush.bf16.xpose.msra.mxu0 0
    %742 = vmatpush.bf16.xpose.msra.mxu0 0
    %743 = vmatpush.bf16.xpose.msra.mxu0 0
    %744 = vmatpush.bf16.xpose.msra.mxu0 0
    %745 = vmatpush.bf16.xpose.msra.mxu0 0
    %746 = vmatpush.bf16.xpose.msra.mxu0 0
    %747 = vmatpush.bf16.xpose.msra.mxu0 %v720
    %748 = vmatmul.bf16.gmra.mxu0 %v738
    %v749 = vpop.f32.mrf.mxu0
    %v750 = vadd.f32 0.0, %v749
    %v751 = vpop.f32.mrf.mxu0
    %752 = vdwg.mxu0
    %754 = vset.pattern.permute.xlu0 0
    %755 = vperm.xlu0 %754, %v732
    %v756 = vpop.permute.xlu0 %755
    %v758 = vperm.slane %v750, 0
    %v759 = vadd.f32 %v756, %v758
    %vm760 = vcmp.gt.f32.partialorder %v759, 0.0
    %v761 = vmul.f32 %v759, 0.01
    %v762 = vsel %vm760, %v759, %v761
    %v763 = vsel %vm54, %v762, -9e+15
    %v764 = vsel %vm197, %v763, -inf
    %765 = vmax.xlane.f32.xlu0 %v764
    %v766 = vpop.xlane.xlu0 %765
    %v767 = vsub.f32 %v763, %v766
    %v768 = vmul.f32 %v767, 1.442695
    %v769 = vpow.pop %v768
    %v770 = vsel %vm197, %v769, 0.0
    %771 = vadd.xlane.f32.xlu0 %v770
    %v772 = vpop.xlane.xlu0 %771
    %v773 = vrcp.pop %v772
    %v774 = vmul.f32 %v769, %v773
    %v775 = vpack.c.bf16 %v774, %v774
    %v777 = vsel %vm197, %v775, 0
    %v780 = vsel %vm213, %v704, 0
    %782 = vmatpush.bf16.msra.mxu0 0
    %783 = vmatpush.bf16.msra.mxu0 0
    %784 = vmatpush.bf16.msra.mxu0 0
    %785 = vmatpush.bf16.msra.mxu0 0
    %786 = vmatpush.bf16.msra.mxu0 0
    %787 = vmatpush.bf16.msra.mxu0 0
    %788 = vmatpush.bf16.msra.mxu0 0
    %789 = vmatpush.bf16.msra.mxu0 %v780
    %790 = vmatmul.bf16.gmra.mxu0 %v777
    %v791 = vpop.f32.mrf.mxu0
    %v792 = vadd.f32 0.0, %v791
    %v793 = vpop.f32.mrf.mxu0
    %794 = vdwg.mxu0
    %vm795 = vcmp.gt.f32.partialorder %v792, 0.0
    %v796 = vmin.f32 %v792, 0.0
    %v797 = vmul.f32 %v796, 1.442695
    %v798 = vpow.pop %v797
    %v799 = vsub.f32 %v798, 1.0
    %v800 = vsel %vm795, %v792, %v799
    %802 = vset.pattern.permute.xlu0 0
    %803 = vperm.xlu0 %802, %v734
    %v804 = vpop.permute.xlu0 %803
    %v806 = vadd.f32 %v804, %v758
    %vm807 = vcmp.gt.f32.partialorder %v806, 0.0
    %v808 = vmul.f32 %v806, 0.01
    %v809 = vsel %vm807, %v806, %v808
    %811 = vrot.lane.b32.xlu0 %v809, 120
    %v812 = vpop.permute.xlu0 %811
    %v814 = vsel %vm54, %v812, -9e+15
    %v815 = vsel %vm197, %v814, -inf
    %816 = vmax.xlane.f32.xlu0 %v815
    %v817 = vpop.xlane.xlu0 %816
    %v818 = vsub.f32 %v814, %v817
    %v819 = vmul.f32 %v818, 1.442695
    %v820 = vpow.pop %v819
    %v821 = vsel %vm197, %v820, 0.0
    %822 = vadd.xlane.f32.xlu0 %v821
    %v823 = vpop.xlane.xlu0 %822
    %v824 = vrcp.pop %v823
    %v825 = vmul.f32 %v820, %v824
    %v826 = vpack.c.bf16 %v825, %v825
    %v828 = vsel %vm197, %v826, 0
    %v831 = vsel %vm213, %v705, 0
    %833 = vmatpush.bf16.msra.mxu0 0
    %834 = vmatpush.bf16.msra.mxu0 0
    %835 = vmatpush.bf16.msra.mxu0 0
    %836 = vmatpush.bf16.msra.mxu0 0
    %837 = vmatpush.bf16.msra.mxu0 0
    %838 = vmatpush.bf16.msra.mxu0 0
    %839 = vmatpush.bf16.msra.mxu0 0
    %840 = vmatpush.bf16.msra.mxu0 %v831
    %841 = vmatmul.bf16.gmra.mxu0 %v828
    %v842 = vpop.f32.mrf.mxu0
    %v843 = vadd.f32 0.0, %v842
    %v844 = vpop.f32.mrf.mxu0
    %845 = vdwg.mxu0
    %vm846 = vcmp.gt.f32.partialorder %v843, 0.0
    %v847 = vmin.f32 %v843, 0.0
    %v848 = vmul.f32 %v847, 1.442695
    %v849 = vpow.pop %v848
    %v850 = vsub.f32 %v849, 1.0
    %v851 = vsel %vm846, %v843, %v850
    %v852 = vpack.c.bf16 %v851, %v800
    %v853 = vld [vmem:[%s8] sm:$0xf]
    %v854 = vld [vmem:[%s8 + $0x4] sm:$0xf]
    %v855 = vld [vmem:[%s9] sm:$0x1]
    %v857 = vperm.slane %v855, 0
    %v861 = vunpack.c.l.b16 %v853
    %v862 = vunpack.c.l.b16 %v854
    %v863 = vpack.c.b16 %v862, %v861
    %v866 = vsel %vm68, %v852, 0
    %868 = vmatpush.bf16.msra.mxu0 0
    %869 = vmatpush.bf16.msra.mxu0 0
    %870 = vmatpush.bf16.msra.mxu0 0
    %871 = vmatpush.bf16.msra.mxu0 0
    %872 = vmatpush.bf16.msra.mxu0 0
    %873 = vmatpush.bf16.msra.mxu0 0
    %874 = vmatpush.bf16.msra.mxu0 0
    %875 = vmatpush.bf16.msra.mxu0 %v863
    %876 = vmatmul.bf16.gmra.mxu0 %v866
    %v877 = vpop.f32.mrf.mxu0
    %v878 = vadd.f32 %v857, %v877
    %v879 = vpop.f32.mrf.mxu0
    %v880 = vadd.f32 %v857, %v879
    %881 = vdwg.mxu0
    %v882 = vmax.f32 %v878, 0.0
    %v883 = vmax.f32 %v880, 0.0
    %v884 = vpack.c.bf16 %v883, %v882
    %v885 = vld [vmem:[%s10] sm:$0xf]
    %v886 = vld [vmem:[%s10 + $0x4] sm:$0xf]
    %v887 = vld [vmem:[%s10 + $0x8] sm:$0xf]
    %v888 = vld [vmem:[%s10 + $0xc] sm:$0xf]
    %v889 = vld [vmem:[%s11] sm:$0x1]
    %v891 = vperm.slane %v889, 0
    %v897 = vunpack.c.l.b16 %v885
    %v898 = vunpack.c.l.b16 %v886
    %v899 = vunpack.c.l.b16 %v887
    %v900 = vunpack.c.l.b16 %v888
    %v901 = vpack.c.b16 %v898, %v897
    %v902 = vpack.c.b16 %v900, %v899
    %v906 = vsel %vm396, %v884, 0
    %908 = vmatpush.bf16.msra.mxu0 0
    %909 = vmatpush.bf16.msra.mxu0 0
    %910 = vmatpush.bf16.msra.mxu0 0
    %911 = vmatpush.bf16.msra.mxu0 0
    %912 = vmatpush.bf16.msra.mxu0 0
    %913 = vmatpush.bf16.msra.mxu0 0
    %914 = vmatpush.bf16.msra.mxu0 %v902
    %915 = vmatpush.bf16.msra.mxu0 %v901
    %916 = vmatmul.bf16.gmra.mxu0 %v906
    %v917 = vpop.f32.mrf.mxu0
    %v918 = vadd.f32 %v891, %v917
    %v919 = vpop.f32.mrf.mxu0
    %v920 = vadd.f32 %v891, %v919
    %921 = vdwg.mxu0
    %v922 = vadd.f32 %v918, %v800
    %v923 = vadd.f32 %v920, %v851
    %v924 = vsel %vm68, %v922, 0.0
    %925 = vadd.xlane.f32.xlu0 %v924
    %v926 = vpop.xlane.xlu0 %925
    %v927 = vsel %vm68, %v923, 0.0
    %928 = vadd.xlane.f32.xlu0 %v927
    %v929 = vpop.xlane.xlu0 %928
    %v930 = vrcp.pop 16.0
    %v931 = vmul.f32 16.0, %v930
    %v932 = vsub.f32 1.0, %v931
    %v933 = vmul.f32 %v930, %v932
    %v934 = vadd.f32 %v930, %v933
    %vm935 = vweird.f32 %v930
    %v936 = vsel %vm935, %v930, %v934
    %v937 = vmul.f32 %v926, %v936
    %v938 = vmul.f32 %v929, %v936
    %v939 = vsub.f32 %v922, %v937
    %v940 = vsub.f32 %v923, %v938
    %v941 = vmul.f32 %v939, %v939
    %v942 = vmul.f32 %v940, %v940
    %v943 = vsel %vm68, %v941, 0.0
    %944 = vadd.xlane.f32.xlu0 %v943
    %v945 = vpop.xlane.xlu0 %944
    %v946 = vsel %vm68, %v942, 0.0
    %947 = vadd.xlane.f32.xlu0 %v946
    %v948 = vpop.xlane.xlu0 %947
    %v949 = vmul.f32 %v945, %v936
    %v950 = vmul.f32 %v948, %v936
    %v951 = vadd.f32 %v949, 1e-05
    %v952 = vadd.f32 %v950, 1e-05
    %v953 = vrsqrt.pop %v951
    %v954 = vmul.f32 %v953, %v951
    %v955 = vmul.f32 %v954, %v953
    %v956 = vmul.f32 0.5, %v955
    %v957 = vsub.f32 1.5, %v956
    %v958 = vmul.f32 %v953, %v957
    %vm959 = vweird.f32 %v951
    %vm960 = vweird.f32 %v953
    %vm961 = vmor %vm959, %vm960
    %v962 = vsel %vm961, %v953, %v958
    %v963 = vrsqrt.pop %v952
    %v964 = vmul.f32 %v963, %v952
    %v965 = vmul.f32 %v964, %v963
    %v966 = vmul.f32 0.5, %v965
    %v967 = vsub.f32 1.5, %v966
    %v968 = vmul.f32 %v963, %v967
    %vm969 = vweird.f32 %v952
    %vm970 = vweird.f32 %v963
    %vm971 = vmor %vm969, %vm970
    %v972 = vsel %vm971, %v963, %v968
    %v973 = vmul.f32 %v939, %v962
    %v974 = vmul.f32 %v940, %v972
    %v975 = vld [vmem:[%s12] sm:$0x1]
    %v977 = vperm.slane %v975, 0
    %v979 = vmul.f32 %v973, %v977
    %v980 = vmul.f32 %v974, %v977
    %v981 = vld [vmem:[%s13] sm:$0x1]
    %v983 = vperm.slane %v981, 0
    %v985 = vadd.f32 %v979, %v983
    %v986 = vadd.f32 %v980, %v983
    %987 = vst.msk [vmem:[#allocation2] sm:$0xff] %vm68, %v985
    %988 = vst.msk [vmem:[#allocation2 + $0x8] sm:$0xff] %vm68, %v986
    // Predicated region
    $region58: #{tpu_custom_call.1} parent=1 // pred_check
      _
    $region59: #{tpu_custom_call.1} parent=1 // pred_check_branch
      %990 = sbr.rel (0) target = $region61
    $region60: #{tpu_custom_call.1} parent=1 // pred_region
      %992 = vsyncadd [#allocation3], 0
      %s993 = sshll.u32 [#allocation2], 4
      %s994 = int_to_ptr.vmem [resolvable:$true] %s993
      %s995 = sshll.u32 %s14, 4
      %s996 = int_to_ptr.hbm [resolvable:$true] %s995
      %1001 = dma.vmem_to_hbm [thread:$0]  %s994, 256, %s996, [#allocation3], 128, 128, 8
    $region61: #{tpu_custom_call.1} parent=1 // pred_fallthru
      _
    // Predicated region
    $region62: #{tpu_custom_call.1} parent=1 // pred_check
      _
    $region63: #{tpu_custom_call.1} parent=1 // pred_check_branch
      %1003 = sbr.rel (0) target = $region65
    $region64: #{tpu_custom_call.1} parent=1 // pred_region
      %1005 = dma.done [#allocation3], 256
    $region65: #{tpu_custom_call.1} parent=1 // pred_fallthru
      _
    %1006 = vsyncpa [#allocation3], 1

</llo_original>
